<compile_context>
chip_gen: v6e
topology: v6e:2x2x1
jax: 0.10.0
libtpu: 0.0.40
codegen_flags: <defaults>
</compile_context>

<pallas_src>
import functools

import jax
import jax.numpy as jnp
from jax import lax
from jax.experimental import pallas as pl
from jax.experimental.pallas import tpu as pltpu


def _attn_kernel(q_ref, k_ref, v_ref, mask_ref,
                 wq_ref, wk_ref, wv_ref, wfc_ref,
                 out_ref, attn_ref,
                 *, n_head, d_k, d_v, temperature):
    # Compute dtype for MXU operands: keep the caller's dtype (bf16 stays bf16
    # on the native MXU path); accumulation is always f32 via
    # preferred_element_type. No forced upcast of q/k/v.
    cdt = q_ref.dtype

    q = q_ref[0]                       # (tq, d_model)
    k = k_ref[0]                       # (Lk, d_model)
    v = v_ref[0]                       # (Lk, d_model)

    # Fused per-head projections: one wide matmul each (fills the MXU N dim
    # with H*d_k / H*d_v columns instead of d_k-sized slivers).
    qh = jnp.dot(q, wq_ref[...], preferred_element_type=jnp.float32)   # (tq, H*d_k)
    kh = jnp.dot(k, wk_ref[...], preferred_element_type=jnp.float32)   # (Lk, H*d_k)
    vh = jnp.dot(v, wv_ref[...], preferred_element_type=jnp.float32)   # (Lk, H*d_v)

    qh = (qh * temperature).astype(cdt)
    kh = kh.astype(cdt)
    vh = vh.astype(cdt)

    masked = mask_ref[0].astype(jnp.int32) != 0                        # (tq, Lk)
    neg_min = jnp.finfo(jnp.float32).min

    head_outs = []
    for h in range(n_head):            # static unroll, static lane slices
        qh_h = qh[:, h * d_k:(h + 1) * d_k]
        kh_h = kh[:, h * d_k:(h + 1) * d_k]
        vh_h = vh[:, h * d_v:(h + 1) * d_v]

        # q @ k^T without materializing a transposed copy of k (contract the
        # last dims of both operands directly).
        scores = lax.dot_general(
            qh_h, kh_h, (((1,), (1,)), ((), ())),
            preferred_element_type=jnp.float32)                         # (tq, Lk)
        scores = jnp.where(masked, neg_min, scores)

        # softmax over keys (f32 math; reciprocal runs on the EUP slot).
        scores = scores - jnp.max(scores, axis=-1, keepdims=True)
        p = jnp.exp(scores)
        p = p * pl.reciprocal(jnp.sum(p, axis=-1, keepdims=True), approx=False)
        # TODO(synk): dropout omitted (eval-mode identity; no in-kernel RNG).

        attn_ref[0, h] = p.astype(attn_ref.dtype)
        head_outs.append(jnp.dot(p.astype(cdt), vh_h,
                                 preferred_element_type=jnp.float32))   # (tq, d_v)

    # Concat-over-heads (head-major columns) then ONE full-depth fc matmul.
    o_all = jnp.concatenate(head_outs, axis=-1).astype(cdt)             # (tq, H*d_v)
    out_ref[0] = jnp.dot(o_all, wfc_ref[...],
                         preferred_element_type=jnp.float32).astype(out_ref.dtype)


def _pick_q_tile(Lq, max_tile):
    """Largest divisor of Lq that is a multiple of 8 and <= max_tile (else Lq)."""
    if Lq <= max_tile:
        return Lq
    t = (max_tile // 8) * 8
    while t >= 8:
        if Lq % t == 0:
            return t
        t -= 8
    return Lq


def interval_infused_attention(q, k, v, w_qs, w_ks, w_vs, w_fc,
                               mask=None, *, n_head, d_k, d_v, q_tile=256):
    """q,k,v: (B, L, d_model). Weights in PyTorch nn.Linear layout:
       w_qs/w_ks: (n_head*d_k, d_model), w_vs: (n_head*d_v, d_model),
       w_fc: (d_model, n_head*d_v). mask: (B, Lq, Lk) or None."""
    B, Lq, d_model = q.shape
    Lk = k.shape[1]
    Lv = v.shape[1]
    assert Lk == Lv

    if mask is None:
        mask8 = jnp.zeros((B, Lq, Lk), jnp.int8)
    else:
        mask8 = (jnp.broadcast_to(mask, (B, Lq, Lk)) != 0).astype(jnp.int8)

    # y = x @ W.T  =>  pass the transposed weights; columns are head-major.
    wq_all = w_qs.T            # (d_model, H*d_k)
    wk_all = w_ks.T            # (d_model, H*d_k)
    wv_all = w_vs.T            # (d_model, H*d_v)
    wfc_all = w_fc.T           # (H*d_v, d_model)

    tq = _pick_q_tile(Lq, q_tile)
    n_qt = Lq // tq

    temperature = float(d_k) ** (-0.5)
    kernel = functools.partial(_attn_kernel, n_head=n_head, d_k=d_k, d_v=d_v,
                               temperature=temperature)

    grid_spec = pltpu.PrefetchScalarGridSpec(
        num_scalar_prefetch=0,
        grid=(B, n_qt),
        in_specs=[
            pl.BlockSpec((1, tq, d_model), lambda b, qi: (b, qi, 0)),
            pl.BlockSpec((1, Lk, d_model), lambda b, qi: (b, 0, 0)),
            pl.BlockSpec((1, Lv, d_model), lambda b, qi: (b, 0, 0)),
            pl.BlockSpec((1, tq, Lk), lambda b, qi: (b, qi, 0)),
            # Weights: full blocks with constant index_map => DMA'd once,
            # resident in VMEM across all grid steps.
            pl.BlockSpec((d_model, n_head * d_k), lambda b, qi: (0, 0)),
            pl.BlockSpec((d_model, n_head * d_k), lambda b, qi: (0, 0)),
            pl.BlockSpec((d_model, n_head * d_v), lambda b, qi: (0, 0)),
            pl.BlockSpec((n_head * d_v, d_model), lambda b, qi: (0, 0)),
        ],
        out_specs=[
            pl.BlockSpec((1, tq, d_model), lambda b, qi: (b, qi, 0)),
            pl.BlockSpec((1, n_head, tq, Lk), lambda b, qi: (b, 0, qi, 0)),
        ],
    )

    out, attn = pl.pallas_call(
        kernel,
        grid_spec=grid_spec,
        out_shape=(
            jax.ShapeDtypeStruct((B, Lq, d_model), q.dtype),
            jax.ShapeDtypeStruct((B, n_head, Lq, Lk), q.dtype),
        ),
        compiler_params=pltpu.CompilerParams(
            dimension_semantics=("parallel", "parallel"),
            vmem_limit_bytes=48 * 1024 * 1024),
    )(q, k, v, mask8, wq_all, wk_all, wv_all, wfc_all)
    return out, attn


def _reference(q, k, v, w_qs, w_ks, w_vs, w_fc, mask, *, n_head, d_k, d_v):
    """Pure-JAX replica of the PyTorch forward (eval mode, dropout = identity)."""
    B, Lq, d_model = q.shape
    Lk = k.shape[1]
    qh = (q @ w_qs.T).reshape(B, Lq, n_head, d_k).transpose(0, 2, 1, 3)
    kh = (k @ w_ks.T).reshape(B, Lk, n_head, d_k).transpose(0, 2, 1, 3)
    vh = (v @ w_vs.T).reshape(B, Lk, n_head, d_v).transpose(0, 2, 1, 3)
    temperature = float(d_k) ** (-0.5)
    attn = jnp.einsum("bhqd,bhkd->bhqk", qh * temperature, kh)
    if mask is not None:
        m = jnp.broadcast_to(mask[:, None, :, :], attn.shape) != 0
        attn = jnp.where(m, jnp.finfo(attn.dtype).min, attn)
    attn = jax.nn.softmax(attn, axis=-1)
    out = jnp.einsum("bhqk,bhkd->bhqd", attn, vh)
    out = out.transpose(0, 2, 1, 3).reshape(B, Lq, n_head * d_v)
    out = out @ w_fc.T
    return out, attn


if __name__ == "__main__":
    # Small shapes consistent with the module.
    B, L, d_model = 2, 8, 32
    n_head, d_k, d_v = 2, 16, 16

    key = jax.random.PRNGKey(0)
    kq, kk, kv, kwq, kwk, kwv, kwf, km = jax.random.split(key, 8)

    q = jax.random.normal(kq, (B, L, d_model), jnp.float32)
    k = jax.random.normal(kk, (B, L, d_model), jnp.float32)
    v = jax.random.normal(kv, (B, L, d_model), jnp.float32)

    # Deterministic parameter init (nn.Linear layout: (out_features, in_features)).
    scale = 1.0 / (d_model ** 0.5)
    w_qs = jax.random.uniform(kwq, (n_head * d_k, d_model), jnp.float32, -scale, scale)
    w_ks = jax.random.uniform(kwk, (n_head * d_k, d_model), jnp.float32, -scale, scale)
    w_vs = jax.random.uniform(kwv, (n_head * d_v, d_model), jnp.float32, -scale, scale)
    w_fc = jax.random.uniform(kwf, (d_model, n_head * d_v), jnp.float32, -scale, scale)

    # Simple padding-style mask: last two key positions masked for batch element 1.
    mask = jnp.zeros((B, L, L), jnp.int32)
    mask = mask.at[1, :, -2:].set(1)

    out, attn = interval_infused_attention(
        q, k, v, w_qs, w_ks, w_vs, w_fc, mask,
        n_head=n_head, d_k=d_k, d_v=d_v)
    jax.block_until_ready((out, attn))

    out_ref, attn_ref = _reference(
        q, k, v, w_qs, w_ks, w_vs, w_fc, mask,
        n_head=n_head, d_k=d_k, d_v=d_v)

    assert out.shape == (B, L, d_model)
    assert attn.shape == (B, n_head, L, L)
    assert jnp.allclose(out, out_ref, rtol=1e-5, atol=1e-5)
    assert jnp.allclose(attn, attn_ref, rtol=1e-5, atol=1e-5)

    print("KERNEL_OK")
</pallas_src>

<mosaic_0001>
module attributes {stable_mosaic.version = 11 : i64} {
  func.func @_attn_kernel(%arg0: i32, %arg1: i32, %arg2: memref<1x8x32xf32, #tpu.memory_space<vmem>>, %arg3: memref<1x8x32xf32, #tpu.memory_space<vmem>>, %arg4: memref<1x8x32xf32, #tpu.memory_space<vmem>>, %arg5: memref<1x8x8xi8, #tpu.memory_space<vmem>>, %arg6: memref<32x32xf32, #tpu.memory_space<vmem>>, %arg7: memref<32x32xf32, #tpu.memory_space<vmem>>, %arg8: memref<32x32xf32, #tpu.memory_space<vmem>>, %arg9: memref<32x32xf32, #tpu.memory_space<vmem>>, %arg10: memref<1x8x32xf32, #tpu.memory_space<vmem>>, %arg11: memref<1x2x8x8xf32, #tpu.memory_space<vmem>>) attributes {dimension_semantics = [#tpu.dimension_semantics<parallel>, #tpu.dimension_semantics<parallel>], iteration_bounds = array<i64: 2, 1>, scalar_prefetch = 0 : i64, scratch_operands = 0 : i64, tpu.core_type = #tpu.core_type<tc>, window_params = [{transform_indices = @transform_0, window_bounds = array<i64: 1, 8, 32>}, {transform_indices = @transform_1, window_bounds = array<i64: 1, 8, 32>}, {transform_indices = @transform_2, window_bounds = array<i64: 1, 8, 32>}, {transform_indices = @transform_3, window_bounds = array<i64: 1, 8, 8>}, {pipeline_mode = #tpu.pipeline_mode<synchronous>, transform_indices = @transform_4, window_bounds = array<i64: 32, 32>}, {pipeline_mode = #tpu.pipeline_mode<synchronous>, transform_indices = @transform_5, window_bounds = array<i64: 32, 32>}, {pipeline_mode = #tpu.pipeline_mode<synchronous>, transform_indices = @transform_6, window_bounds = array<i64: 32, 32>}, {pipeline_mode = #tpu.pipeline_mode<synchronous>, transform_indices = @transform_7, window_bounds = array<i64: 32, 32>}, {transform_indices = @transform_8, window_bounds = array<i64: 1, 8, 32>}, {transform_indices = @transform_9, window_bounds = array<i64: 1, 2, 8, 8>}]} {
    %c0 = arith.constant 0 : index
    %c0_0 = arith.constant 0 : index
    %c0_1 = arith.constant 0 : index
    %0 = vector.load %arg2[%c0, %c0_0, %c0_1] : memref<1x8x32xf32, #tpu.memory_space<vmem>>, vector<1x8x32xf32>
    %1 = vector.shape_cast %0 : vector<1x8x32xf32> to vector<8x32xf32>
    %c0_2 = arith.constant 0 : index
    %c0_3 = arith.constant 0 : index
    %c0_4 = arith.constant 0 : index
    %2 = vector.load %arg3[%c0_2, %c0_3, %c0_4] : memref<1x8x32xf32, #tpu.memory_space<vmem>>, vector<1x8x32xf32>
    %3 = vector.shape_cast %2 : vector<1x8x32xf32> to vector<8x32xf32>
    %c0_5 = arith.constant 0 : index
    %c0_6 = arith.constant 0 : index
    %c0_7 = arith.constant 0 : index
    %4 = vector.load %arg4[%c0_5, %c0_6, %c0_7] : memref<1x8x32xf32, #tpu.memory_space<vmem>>, vector<1x8x32xf32>
    %5 = vector.shape_cast %4 : vector<1x8x32xf32> to vector<8x32xf32>
    %c0_8 = arith.constant 0 : index
    %c0_9 = arith.constant 0 : index
    %6 = vector.load %arg6[%c0_8, %c0_9] : memref<32x32xf32, #tpu.memory_space<vmem>>, vector<32x32xf32>
    %cst = arith.constant dense<0.000000e+00> : vector<8x32xf32>
    %7 = tpu.matmul %1, %6, %cst {dimension_numbers = #tpu.dot_dimension_numbers<[1], [0], [0], [1], [0, 0, 1, 1], [], []>} : vector<8x32xf32>, vector<32x32xf32>, vector<8x32xf32> -> vector<8x32xf32>
    %c0_10 = arith.constant 0 : index
    %c0_11 = arith.constant 0 : index
    %8 = vector.load %arg7[%c0_10, %c0_11] : memref<32x32xf32, #tpu.memory_space<vmem>>, vector<32x32xf32>
    %cst_12 = arith.constant dense<0.000000e+00> : vector<8x32xf32>
    %9 = tpu.matmul %3, %8, %cst_12 {dimension_numbers = #tpu.dot_dimension_numbers<[1], [0], [0], [1], [0, 0, 1, 1], [], []>} : vector<8x32xf32>, vector<32x32xf32>, vector<8x32xf32> -> vector<8x32xf32>
    %c0_13 = arith.constant 0 : index
    %c0_14 = arith.constant 0 : index
    %10 = vector.load %arg8[%c0_13, %c0_14] : memref<32x32xf32, #tpu.memory_space<vmem>>, vector<32x32xf32>
    %cst_15 = arith.constant dense<0.000000e+00> : vector<8x32xf32>
    %11 = tpu.matmul %5, %10, %cst_15 {dimension_numbers = #tpu.dot_dimension_numbers<[1], [0], [0], [1], [0, 0, 1, 1], [], []>} : vector<8x32xf32>, vector<32x32xf32>, vector<8x32xf32> -> vector<8x32xf32>
    %cst_16 = arith.constant 2.500000e-01 : f32
    %12 = vector.broadcast %cst_16 : f32 to vector<8x32xf32>
    %13 = arith.mulf %7, %12 : vector<8x32xf32>
    %c0_17 = arith.constant 0 : index
    %c0_18 = arith.constant 0 : index
    %c0_19 = arith.constant 0 : index
    %14 = vector.load %arg5[%c0_17, %c0_18, %c0_19] : memref<1x8x8xi8, #tpu.memory_space<vmem>>, vector<1x8x8xi8>
    %15 = vector.shape_cast %14 : vector<1x8x8xi8> to vector<8x8xi8>
    %16 = arith.extsi %15 : vector<8x8xi8> to vector<8x8xi32>
    %c0_i32 = arith.constant 0 : i32
    %17 = vector.broadcast %c0_i32 : i32 to vector<8x8xi32>
    %18 = arith.cmpi ne, %16, %17 : vector<8x8xi32>
    %19 = vector.extract_strided_slice %13 {offsets = [0, 0], sizes = [8, 16], strides = [1, 1]} : vector<8x32xf32> to vector<8x16xf32>
    %20 = vector.extract_strided_slice %9 {offsets = [0, 0], sizes = [8, 16], strides = [1, 1]} : vector<8x32xf32> to vector<8x16xf32>
    %21 = vector.extract_strided_slice %11 {offsets = [0, 0], sizes = [8, 16], strides = [1, 1]} : vector<8x32xf32> to vector<8x16xf32>
    %cst_20 = arith.constant dense<0.000000e+00> : vector<8x8xf32>
    %22 = tpu.matmul %19, %20, %cst_20 {dimension_numbers = #tpu.dot_dimension_numbers<[1], [1], [0], [0], [0, 0, 1, 0], [], []>} : vector<8x16xf32>, vector<8x16xf32>, vector<8x8xf32> -> vector<8x8xf32>
    %cst_21 = arith.constant -3.40282347E+38 : f32
    %23 = vector.broadcast %cst_21 : f32 to vector<8x8xf32>
    %24 = arith.select %18, %23, %22 : vector<8x8xi1>, vector<8x8xf32>
    %cst_22 = arith.constant dense<0xFF800000> : vector<8xf32>
    %25 = vector.multi_reduction <maximumf>, %24, %cst_22 [1] : vector<8x8xf32> to vector<8xf32>
    %26 = vector.shape_cast %25 : vector<8xf32> to vector<8x1xf32>
    %27 = vector.broadcast %26 : vector<8x1xf32> to vector<8x8xf32>
    %28 = arith.subf %24, %27 : vector<8x8xf32>
    %29 = math.exp %28 : vector<8x8xf32>
    %cst_23 = arith.constant dense<0.000000e+00> : vector<8xf32>
    %30 = vector.multi_reduction <add>, %29, %cst_23 [1] : vector<8x8xf32> to vector<8xf32>
    %31 = vector.shape_cast %30 : vector<8xf32> to vector<8x1xf32>
    %32 = tpu.reciprocal %31 : vector<8x1xf32> -> vector<8x1xf32>
    %33 = vector.broadcast %32 : vector<8x1xf32> to vector<8x8xf32>
    %34 = arith.mulf %29, %33 : vector<8x8xf32>
    %c0_24 = arith.constant 0 : index
    %c0_25 = arith.constant 0 : index
    %c0_26 = arith.constant 0 : index
    %c0_27 = arith.constant 0 : index
    %35 = vector.load %arg11[%c0_24, %c0_25, %c0_26, %c0_27] : memref<1x2x8x8xf32, #tpu.memory_space<vmem>>, vector<1x1x8x8xf32>
    %36 = vector.shape_cast %35 : vector<1x1x8x8xf32> to vector<8x8xf32>
    %37 = vector.shape_cast %34 : vector<8x8xf32> to vector<1x1x8x8xf32>
    tpu.vector_store %arg11[%c0_24, %c0_25, %c0_26, %c0_27], %37 {strides = array<i32>} : memref<1x2x8x8xf32, #tpu.memory_space<vmem>>, vector<1x1x8x8xf32>,
    %cst_28 = arith.constant dense<0.000000e+00> : vector<8x16xf32>
    %38 = tpu.matmul %34, %21, %cst_28 {dimension_numbers = #tpu.dot_dimension_numbers<[1], [0], [0], [1], [0, 0, 1, 1], [], []>} : vector<8x8xf32>, vector<8x16xf32>, vector<8x16xf32> -> vector<8x16xf32>
    %39 = vector.extract_strided_slice %13 {offsets = [0, 16], sizes = [8, 16], strides = [1, 1]} : vector<8x32xf32> to vector<8x16xf32>
    %40 = vector.extract_strided_slice %9 {offsets = [0, 16], sizes = [8, 16], strides = [1, 1]} : vector<8x32xf32> to vector<8x16xf32>
    %41 = vector.extract_strided_slice %11 {offsets = [0, 16], sizes = [8, 16], strides = [1, 1]} : vector<8x32xf32> to vector<8x16xf32>
    %cst_29 = arith.constant dense<0.000000e+00> : vector<8x8xf32>
    %42 = tpu.matmul %39, %40, %cst_29 {dimension_numbers = #tpu.dot_dimension_numbers<[1], [1], [0], [0], [0, 0, 1, 0], [], []>} : vector<8x16xf32>, vector<8x16xf32>, vector<8x8xf32> -> vector<8x8xf32>
    %cst_30 = arith.constant -3.40282347E+38 : f32
    %43 = vector.broadcast %cst_30 : f32 to vector<8x8xf32>
    %44 = arith.select %18, %43, %42 : vector<8x8xi1>, vector<8x8xf32>
    %cst_31 = arith.constant dense<0xFF800000> : vector<8xf32>
    %45 = vector.multi_reduction <maximumf>, %44, %cst_31 [1] : vector<8x8xf32> to vector<8xf32>
    %46 = vector.shape_cast %45 : vector<8xf32> to vector<8x1xf32>
    %47 = vector.broadcast %46 : vector<8x1xf32> to vector<8x8xf32>
    %48 = arith.subf %44, %47 : vector<8x8xf32>
    %49 = math.exp %48 : vector<8x8xf32>
    %cst_32 = arith.constant dense<0.000000e+00> : vector<8xf32>
    %50 = vector.multi_reduction <add>, %49, %cst_32 [1] : vector<8x8xf32> to vector<8xf32>
    %51 = vector.shape_cast %50 : vector<8xf32> to vector<8x1xf32>
    %52 = tpu.reciprocal %51 : vector<8x1xf32> -> vector<8x1xf32>
    %53 = vector.broadcast %52 : vector<8x1xf32> to vector<8x8xf32>
    %54 = arith.mulf %49, %53 : vector<8x8xf32>
    %c0_33 = arith.constant 0 : index
    %c1 = arith.constant 1 : index
    %c0_34 = arith.constant 0 : index
    %c0_35 = arith.constant 0 : index
    %55 = vector.load %arg11[%c0_33, %c1, %c0_34, %c0_35] : memref<1x2x8x8xf32, #tpu.memory_space<vmem>>, vector<1x1x8x8xf32>
    %56 = vector.shape_cast %55 : vector<1x1x8x8xf32> to vector<8x8xf32>
    %57 = vector.shape_cast %54 : vector<8x8xf32> to vector<1x1x8x8xf32>
    tpu.vector_store %arg11[%c0_33, %c1, %c0_34, %c0_35], %57 {strides = array<i32>} : memref<1x2x8x8xf32, #tpu.memory_space<vmem>>, vector<1x1x8x8xf32>,
    %cst_36 = arith.constant dense<0.000000e+00> : vector<8x16xf32>
    %58 = tpu.matmul %54, %41, %cst_36 {dimension_numbers = #tpu.dot_dimension_numbers<[1], [0], [0], [1], [0, 0, 1, 1], [], []>} : vector<8x8xf32>, vector<8x16xf32>, vector<8x16xf32> -> vector<8x16xf32>
    %59 = tpu.concatenate %38, %58 in 1 : vector<8x16xf32>, vector<8x16xf32> -> vector<8x32xf32>
    %c0_37 = arith.constant 0 : index
    %c0_38 = arith.constant 0 : index
    %60 = vector.load %arg9[%c0_37, %c0_38] : memref<32x32xf32, #tpu.memory_space<vmem>>, vector<32x32xf32>
    %cst_39 = arith.constant dense<0.000000e+00> : vector<8x32xf32>
    %61 = tpu.matmul %59, %60, %cst_39 {dimension_numbers = #tpu.dot_dimension_numbers<[1], [0], [0], [1], [0, 0, 1, 1], [], []>} : vector<8x32xf32>, vector<32x32xf32>, vector<8x32xf32> -> vector<8x32xf32>
    %c0_40 = arith.constant 0 : index
    %c0_41 = arith.constant 0 : index
    %c0_42 = arith.constant 0 : index
    %62 = vector.load %arg10[%c0_40, %c0_41, %c0_42] : memref<1x8x32xf32, #tpu.memory_space<vmem>>, vector<1x8x32xf32>
    %63 = vector.shape_cast %62 : vector<1x8x32xf32> to vector<8x32xf32>
    %64 = vector.shape_cast %61 : vector<8x32xf32> to vector<1x8x32xf32>
    tpu.vector_store %arg10[%c0_40, %c0_41, %c0_42], %64 {strides = array<i32>} : memref<1x8x32xf32, #tpu.memory_space<vmem>>, vector<1x8x32xf32>,
    return
  }
  func.func @transform_0(%arg0: i32, %arg1: i32) -> (i32, i32, i32) {
    %c0_i32 = arith.constant 0 : i32
    %c0_i32_0 = arith.constant 0 : i32
    return %arg0, %arg1, %c0_i32 : i32, i32, i32
  }
  func.func @transform_1(%arg0: i32, %arg1: i32) -> (i32, i32, i32) {
    %c0_i32 = arith.constant 0 : i32
    %c0_i32_0 = arith.constant 0 : i32
    %c0_i32_1 = arith.constant 0 : i32
    return %arg0, %c0_i32, %c0_i32_0 : i32, i32, i32
  }
  func.func @transform_2(%arg0: i32, %arg1: i32) -> (i32, i32, i32) {
    %c0_i32 = arith.constant 0 : i32
    %c0_i32_0 = arith.constant 0 : i32
    %c0_i32_1 = arith.constant 0 : i32
    return %arg0, %c0_i32, %c0_i32_0 : i32, i32, i32
  }
  func.func @transform_3(%arg0: i32, %arg1: i32) -> (i32, i32, i32) {
    %c0_i32 = arith.constant 0 : i32
    %c0_i32_0 = arith.constant 0 : i32
    return %arg0, %arg1, %c0_i32 : i32, i32, i32
  }
  func.func @transform_4(%arg0: i32, %arg1: i32) -> (i32, i32) {
    %c0_i32 = arith.constant 0 : i32
    %c0_i32_0 = arith.constant 0 : i32
    %c0_i32_1 = arith.constant 0 : i32
    return %c0_i32, %c0_i32_0 : i32, i32
  }
  func.func @transform_5(%arg0: i32, %arg1: i32) -> (i32, i32) {
    %c0_i32 = arith.constant 0 : i32
    %c0_i32_0 = arith.constant 0 : i32
    %c0_i32_1 = arith.constant 0 : i32
    return %c0_i32, %c0_i32_0 : i32, i32
  }
  func.func @transform_6(%arg0: i32, %arg1: i32) -> (i32, i32) {
    %c0_i32 = arith.constant 0 : i32
    %c0_i32_0 = arith.constant 0 : i32
    %c0_i32_1 = arith.constant 0 : i32
    return %c0_i32, %c0_i32_0 : i32, i32
  }
  func.func @transform_7(%arg0: i32, %arg1: i32) -> (i32, i32) {
    %c0_i32 = arith.constant 0 : i32
    %c0_i32_0 = arith.constant 0 : i32
    %c0_i32_1 = arith.constant 0 : i32
    return %c0_i32, %c0_i32_0 : i32, i32
  }
  func.func @transform_8(%arg0: i32, %arg1: i32) -> (i32, i32, i32) {
    %c0_i32 = arith.constant 0 : i32
    %c0_i32_0 = arith.constant 0 : i32
    return %arg0, %arg1, %c0_i32 : i32, i32, i32
  }
  func.func @transform_9(%arg0: i32, %arg1: i32) -> (i32, i32, i32, i32) {
    %c0_i32 = arith.constant 0 : i32
    %c0_i32_0 = arith.constant 0 : i32
    %c0_i32_1 = arith.constant 0 : i32
    return %arg0, %c0_i32, %arg1, %c0_i32_0 : i32, i32, i32, i32
  }
}

</mosaic_0001>

<llo_original>
// kernel: tpu_custom_call.1
$region0: #{tpu_custom_call.1}
  #allocation0 [shape = 'u32[]', space=smem, size = 0x4, offset = 0x4, fixed_abs, tag = 'smem constant byte address 0x4 - core index']
  #allocation1 [shape = 'u32[144,128]{1,0:T(1,128)}', space=vmem, size = 0x12000, scoped, tag = 'internal scratch']
  %s0 = inlined_call_operand.hbm [shape: f32[2,8,32], index: 0, kind: input, shape index: {}]
  %s1 = inlined_call_operand.hbm [shape: f32[2,8,32], index: 1, kind: input, shape index: {}]
  %s2 = inlined_call_operand.hbm [shape: f32[2,8,32], index: 2, kind: input, shape index: {}]
  %s3 = inlined_call_operand.vmem [shape: s8[2,8,8], index: 3, kind: input, shape index: {}]
  %s4 = inlined_call_operand.hbm [shape: f32[32,32], index: 4, kind: input, shape index: {}]
  %s5 = inlined_call_operand.hbm [shape: f32[32,32], index: 5, kind: input, shape index: {}]
  %s6 = inlined_call_operand.hbm [shape: f32[32,32], index: 6, kind: input, shape index: {}]
  %s7 = inlined_call_operand.hbm [shape: f32[32,32], index: 7, kind: input, shape index: {}]
  %s8 = inlined_call_operand.hbm [shape: f32[2,8,32], index: 8, kind: output, shape index: {0}]
  %s9 = inlined_call_operand.hbm [shape: f32[2,2,8,8], index: 9, kind: output, shape index: {1}]
  %10 = xla_tuple %s8, %s9
  %s11 = sld [smem:[#allocation0]]
  $region101: #{tpu_custom_call.1} parent=0
    _
  %s13 = ssub.s32 1, %s11
  %s14 = scalar_select 0, %s13, %s11
  $region1: #{tpu_custom_call.1} parent=0
    #allocation2 [shape = 'u8[8192]{0}', space=vmem, size = 0x2000, scoped, tag = 'input window, operand 0']
    #allocation3 [shape = 's32[2]{0}', space=sflag, size = 0x8, scoped, tag = 'scoped memory for tpu_custom_call.1']
    #allocation4 [shape = 's32[2]{0}', space=sflag, size = 0x8, scoped, tag = 'scoped memory for tpu_custom_call.1']
    #allocation5 [shape = 'u8[8192]{0}', space=vmem, size = 0x2000, scoped, tag = 'input window, operand 1']
    #allocation6 [shape = 's32[2]{0}', space=sflag, size = 0x8, scoped, tag = 'scoped memory for tpu_custom_call.1']
    #allocation7 [shape = 'u8[8192]{0}', space=vmem, size = 0x2000, scoped, tag = 'input window, operand 2']
    #allocation8 [shape = 'u8[16384]{0}', space=vmem, size = 0x4000, scoped, tag = 'input window, operand 4, single buffered']
    #allocation9 [shape = 's32[1]{0}', space=sflag, size = 0x4, scoped, tag = 'scoped memory for tpu_custom_call.1']
    #allocation10 [shape = 'u8[16384]{0}', space=vmem, size = 0x4000, scoped, tag = 'input window, operand 5, single buffered']
    #allocation11 [shape = 'u8[16384]{0}', space=vmem, size = 0x4000, scoped, tag = 'input window, operand 6, single buffered']
    #allocation12 [shape = 's32[1]{0}', space=sflag, size = 0x4, scoped, tag = 'scoped memory for tpu_custom_call.1']
    #allocation13 [shape = 'u8[16384]{0}', space=vmem, size = 0x4000, scoped, tag = 'input window, operand 7, single buffered']
    #allocation14 [shape = 'u8[8192]{0}', space=vmem, size = 0x2000, scoped, tag = 'output window, operand 0']
    #allocation15 [shape = 'u8[16384]{0}', space=vmem, size = 0x4000, scoped, tag = 'output window, operand 1']
    #allocation16 [shape = 's32[2]{0}', space=sflag, size = 0x8, scoped, tag = 'scoped memory for tpu_custom_call.1']
    %15 = vsyncpa [#allocation3], 0
    %s16 = scalar_lea.sflag [#allocation3], 1
    %17 = vsyncpa %s16, 0
    %18 = vsyncpa [#allocation6], 0
    %s19 = scalar_lea.sflag [#allocation6], 1
    %20 = vsyncpa %s19, 0
    %21 = vsyncpa [#allocation9], 0
    %22 = vsyncpa [#allocation12], 0
    %23 = vsyncpa [#allocation4], 0
    %s24 = scalar_lea.sflag [#allocation4], 1
    %25 = vsyncpa %s24, 0
    %26 = vsyncpa [#allocation16], 0
    %s27 = scalar_lea.sflag [#allocation16], 1
    %28 = vsyncpa %s27, 0
    loop: start=0, step=1, limit=4
    $region2: #{tpu_custom_call.1} parent=1 // loop_pre_header
      _
    $region3: #{tpu_custom_call.1} parent=1 // loop_header
      %s30 = sphi 0, %s34
      %p31 = scmp.ge.s32.totalorder %s30, 4
      %s37 = sphi 0, %s49
      %s38 = sphi 0, %s45
      %s39 = sphi 0, %s37
      %s40 = sphi 0, %s38
      %s41 = sphi 0, %s39
      %s42 = sphi 0, %s40
      %s54 = sphi 0, %s56
      %s57 = sphi 0, %s54
      %s58 = sphi 0, %s57
      %s74 = sphi 0, %s58
      %s80 = sphi 0, %s82
      %s83 = sphi 0, %s80
      %s84 = sphi 0, %s83
      %s100 = sphi 0, %s84
      %s106 = sphi 0, %s108
      %s109 = sphi 0, %s106
      %s110 = sphi 0, %s109
      %s126 = sphi 0, %s110
      %s134 = sphi 0, %s136
      %s137 = sphi 0, %s134
      %s138 = sphi 0, %s137
      %s154 = sphi 0, %s138
      %s158 = sphi 0, %s158
      %s160 = sphi 0, %s158
      %s161 = sphi 0, %s160
      %s175 = sphi 0, %s161
      %s179 = sphi 0, %s179
      %s181 = sphi 0, %s179
      %s182 = sphi 0, %s181
      %s196 = sphi 0, %s182
      %s200 = sphi 0, %s200
      %s202 = sphi 0, %s200
      %s203 = sphi 0, %s202
      %s217 = sphi 0, %s203
      %s221 = sphi 0, %s221
      %s223 = sphi 0, %s221
      %s224 = sphi 0, %s223
      %s238 = sphi 0, %s224
      %s246 = sphi 0, %s248
      %s249 = sphi 0, %s246
      %s250 = sphi 0, %s249
      %s266 = sphi 0, %s250
      %s274 = sphi 0, %s276
      %s277 = sphi 0, %s274
      %s278 = sphi 0, %s277
      %s294 = sphi 0, %s278
    $region4: #{tpu_custom_call.1} parent=1 // loop_header_branch
      %33 = sbr.rel (%p31) target = $region8
    $region5: #{tpu_custom_call.1} parent=1 // loop_body
      %s35 = ssub.s32 %s30, 1
      %s36 = ssub.s32 %s30, 2
      %s43 = sadd.s32 1, %s38
      %p44 = scmp.ge.s32.totalorder %s43, 1
      %s45 = scalar_select %p44, 0, %s43
      %s46 = sadd.s32 1, %s37
      %s47 = scalar_select %p44, %s46, %s37
      %p48 = scmp.ge.s32.totalorder %s47, 2
      %s49 = scalar_select %p48, 0, %s47
      %s50 = ssub.s32 %s37, %s49
      %s51 = ssub.s32 %s38, %s45
      %s52 = sor.u32 %s50, %s51
      %p53 = scmp.eq.s32.totalorder %s52, 0
      %s55 = sadd.s32 %s54, 1
      %s56 = scalar_select %p53, %s54, %s55
      %p59 = pneg %p53
      %p60 = scmp.eq.s32.totalorder %s30, 1
      %p61 = por %p59, %p60
      %p62 = scmp.ne.s32.totalorder %s54, %s57
      %p63 = scmp.eq.s32.totalorder %s30, 0
      %p64 = por %p62, %p63
      %p65 = scmp.ne.s32.totalorder %s54, %s57
      %p66 = scmp.eq.s32.totalorder %s35, 1
      %p67 = por %p65, %p66
      %p68 = scmp.ne.s32.totalorder %s57, %s58
      %p69 = scmp.eq.s32.totalorder %s35, 0
      %p70 = por %p68, %p69
      %p71 = scmp.ne.s32.totalorder %s57, %s58
      %p72 = scmp.eq.s32.totalorder %s36, 1
      %p73 = por %p71, %p72
      %p75 = scmp.ne.s32.totalorder %s58, %s74
      %p76 = scmp.eq.s32.totalorder %s36, 0
      %p77 = por %p75, %p76
      %s78 = ssub.s32 %s37, %s49
      %p79 = scmp.eq.s32.totalorder %s78, 0
      %s81 = sadd.s32 %s80, 1
      %s82 = scalar_select %p79, %s80, %s81
      %p85 = pneg %p79
      %p86 = scmp.eq.s32.totalorder %s30, 1
      %p87 = por %p85, %p86
      %p88 = scmp.ne.s32.totalorder %s80, %s83
      %p89 = scmp.eq.s32.totalorder %s30, 0
      %p90 = por %p88, %p89
      %p91 = scmp.ne.s32.totalorder %s80, %s83
      %p92 = scmp.eq.s32.totalorder %s35, 1
      %p93 = por %p91, %p92
      %p94 = scmp.ne.s32.totalorder %s83, %s84
      %p95 = scmp.eq.s32.totalorder %s35, 0
      %p96 = por %p94, %p95
      %p97 = scmp.ne.s32.totalorder %s83, %s84
      %p98 = scmp.eq.s32.totalorder %s36, 1
      %p99 = por %p97, %p98
      %p101 = scmp.ne.s32.totalorder %s84, %s100
      %p102 = scmp.eq.s32.totalorder %s36, 0
      %p103 = por %p101, %p102
      %s104 = ssub.s32 %s37, %s49
      %p105 = scmp.eq.s32.totalorder %s104, 0
      %s107 = sadd.s32 %s106, 1
      %s108 = scalar_select %p105, %s106, %s107
      %p111 = pneg %p105
      %p112 = scmp.eq.s32.totalorder %s30, 1
      %p113 = por %p111, %p112
      %p114 = scmp.ne.s32.totalorder %s106, %s109
      %p115 = scmp.eq.s32.totalorder %s30, 0
      %p116 = por %p114, %p115
      %p117 = scmp.ne.s32.totalorder %s106, %s109
      %p118 = scmp.eq.s32.totalorder %s35, 1
      %p119 = por %p117, %p118
      %p120 = scmp.ne.s32.totalorder %s109, %s110
      %p121 = scmp.eq.s32.totalorder %s35, 0
      %p122 = por %p120, %p121
      %p123 = scmp.ne.s32.totalorder %s109, %s110
      %p124 = scmp.eq.s32.totalorder %s36, 1
      %p125 = por %p123, %p124
      %p127 = scmp.ne.s32.totalorder %s110, %s126
      %p128 = scmp.eq.s32.totalorder %s36, 0
      %p129 = por %p127, %p128
      %s130 = ssub.s32 %s37, %s49
      %s131 = ssub.s32 %s38, %s45
      %s132 = sor.u32 %s130, %s131
      %p133 = scmp.eq.s32.totalorder %s132, 0
      %s135 = sadd.s32 %s134, 1
      %s136 = scalar_select %p133, %s134, %s135
      %p139 = pneg %p133
      %p140 = scmp.eq.s32.totalorder %s30, 1
      %p141 = por %p139, %p140
      %p142 = scmp.ne.s32.totalorder %s134, %s137
      %p143 = scmp.eq.s32.totalorder %s30, 0
      %p144 = por %p142, %p143
      %p145 = scmp.ne.s32.totalorder %s134, %s137
      %p146 = scmp.eq.s32.totalorder %s35, 1
      %p147 = por %p145, %p146
      %p148 = scmp.ne.s32.totalorder %s137, %s138
      %p149 = scmp.eq.s32.totalorder %s35, 0
      %p150 = por %p148, %p149
      %p151 = scmp.ne.s32.totalorder %s137, %s138
      %p152 = scmp.eq.s32.totalorder %s36, 1
      %p153 = por %p151, %p152
      %p155 = scmp.ne.s32.totalorder %s138, %s154
      %p156 = scmp.eq.s32.totalorder %s36, 0
      %p157 = por %p155, %p156
      %s159 = sadd.s32 %s158, 1
      %p162 = scmp.eq.s32.totalorder %s30, 1
      %p163 = scmp.ne.s32.totalorder %s158, %s160
      %p164 = scmp.eq.s32.totalorder %s30, 0
      %p165 = por %p163, %p164
      %p166 = scmp.ne.s32.totalorder %s158, %s160
      %p167 = scmp.eq.s32.totalorder %s35, 1
      %p168 = por %p166, %p167
      %p169 = scmp.ne.s32.totalorder %s160, %s161
      %p170 = scmp.eq.s32.totalorder %s35, 0
      %p171 = por %p169, %p170
      %p172 = scmp.ne.s32.totalorder %s160, %s161
      %p173 = scmp.eq.s32.totalorder %s36, 1
      %p174 = por %p172, %p173
      %p176 = scmp.ne.s32.totalorder %s161, %s175
      %p177 = scmp.eq.s32.totalorder %s36, 0
      %p178 = por %p176, %p177
      %s180 = sadd.s32 %s179, 1
      %p183 = scmp.eq.s32.totalorder %s30, 1
      %p184 = scmp.ne.s32.totalorder %s179, %s181
      %p185 = scmp.eq.s32.totalorder %s30, 0
      %p186 = por %p184, %p185
      %p187 = scmp.ne.s32.totalorder %s179, %s181
      %p188 = scmp.eq.s32.totalorder %s35, 1
      %p189 = por %p187, %p188
      %p190 = scmp.ne.s32.totalorder %s181, %s182
      %p191 = scmp.eq.s32.totalorder %s35, 0
      %p192 = por %p190, %p191
      %p193 = scmp.ne.s32.totalorder %s181, %s182
      %p194 = scmp.eq.s32.totalorder %s36, 1
      %p195 = por %p193, %p194
      %p197 = scmp.ne.s32.totalorder %s182, %s196
      %p198 = scmp.eq.s32.totalorder %s36, 0
      %p199 = por %p197, %p198
      %s201 = sadd.s32 %s200, 1
      %p204 = scmp.eq.s32.totalorder %s30, 1
      %p205 = scmp.ne.s32.totalorder %s200, %s202
      %p206 = scmp.eq.s32.totalorder %s30, 0
      %p207 = por %p205, %p206
      %p208 = scmp.ne.s32.totalorder %s200, %s202
      %p209 = scmp.eq.s32.totalorder %s35, 1
      %p210 = por %p208, %p209
      %p211 = scmp.ne.s32.totalorder %s202, %s203
      %p212 = scmp.eq.s32.totalorder %s35, 0
      %p213 = por %p211, %p212
      %p214 = scmp.ne.s32.totalorder %s202, %s203
      %p215 = scmp.eq.s32.totalorder %s36, 1
      %p216 = por %p214, %p215
      %p218 = scmp.ne.s32.totalorder %s203, %s217
      %p219 = scmp.eq.s32.totalorder %s36, 0
      %p220 = por %p218, %p219
      %s222 = sadd.s32 %s221, 1
      %p225 = scmp.eq.s32.totalorder %s30, 1
      %p226 = scmp.ne.s32.totalorder %s221, %s223
      %p227 = scmp.eq.s32.totalorder %s30, 0
      %p228 = por %p226, %p227
      %p229 = scmp.ne.s32.totalorder %s221, %s223
      %p230 = scmp.eq.s32.totalorder %s35, 1
      %p231 = por %p229, %p230
      %p232 = scmp.ne.s32.totalorder %s223, %s224
      %p233 = scmp.eq.s32.totalorder %s35, 0
      %p234 = por %p232, %p233
      %p235 = scmp.ne.s32.totalorder %s223, %s224
      %p236 = scmp.eq.s32.totalorder %s36, 1
      %p237 = por %p235, %p236
      %p239 = scmp.ne.s32.totalorder %s224, %s238
      %p240 = scmp.eq.s32.totalorder %s36, 0
      %p241 = por %p239, %p240
      %s242 = ssub.s32 %s37, %s49
      %s243 = ssub.s32 %s38, %s45
      %s244 = sor.u32 %s242, %s243
      %p245 = scmp.eq.s32.totalorder %s244, 0
      %s247 = sadd.s32 %s246, 1
      %s248 = scalar_select %p245, %s246, %s247
      %p251 = pneg %p245
      %p252 = scmp.eq.s32.totalorder %s30, 1
      %p253 = por %p251, %p252
      %p254 = scmp.ne.s32.totalorder %s246, %s249
      %p255 = scmp.eq.s32.totalorder %s30, 0
      %p256 = por %p254, %p255
      %p257 = scmp.ne.s32.totalorder %s246, %s249
      %p258 = scmp.eq.s32.totalorder %s35, 1
      %p259 = por %p257, %p258
      %p260 = scmp.ne.s32.totalorder %s249, %s250
      %p261 = scmp.eq.s32.totalorder %s35, 0
      %p262 = por %p260, %p261
      %p263 = scmp.ne.s32.totalorder %s249, %s250
      %p264 = scmp.eq.s32.totalorder %s36, 1
      %p265 = por %p263, %p264
      %p267 = scmp.ne.s32.totalorder %s250, %s266
      %p268 = scmp.eq.s32.totalorder %s36, 0
      %p269 = por %p267, %p268
      %s270 = ssub.s32 %s37, %s49
      %s271 = ssub.s32 %s38, %s45
      %s272 = sor.u32 %s270, %s271
      %p273 = scmp.eq.s32.totalorder %s272, 0
      %s275 = sadd.s32 %s274, 1
      %s276 = scalar_select %p273, %s274, %s275
      %p279 = pneg %p273
      %p280 = scmp.eq.s32.totalorder %s30, 1
      %p281 = por %p279, %p280
      %p282 = scmp.ne.s32.totalorder %s274, %s277
      %p283 = scmp.eq.s32.totalorder %s30, 0
      %p284 = por %p282, %p283
      %p285 = scmp.ne.s32.totalorder %s274, %s277
      %p286 = scmp.eq.s32.totalorder %s35, 1
      %p287 = por %p285, %p286
      %p288 = scmp.ne.s32.totalorder %s277, %s278
      %p289 = scmp.eq.s32.totalorder %s35, 0
      %p290 = por %p288, %p289
      %p291 = scmp.ne.s32.totalorder %s277, %s278
      %p292 = scmp.eq.s32.totalorder %s36, 1
      %p293 = por %p291, %p292
      %p295 = scmp.ne.s32.totalorder %s278, %s294
      %p296 = scmp.eq.s32.totalorder %s36, 0
      %p297 = por %p295, %p296
      %p298 = scmp.le.s32.totalorder 1, %s30
      %p299 = scmp.lt.s32.totalorder %s30, 3
      %p300 = pnand %p298, %p299
      %p301 = pneg %p300
      // Predicated region
      $region9: #{tpu_custom_call.1} parent=5 // pred_check
        _
      $region10: #{tpu_custom_call.1} parent=5 // pred_check_branch
        %303 = sbr.rel (%p300) target = $region12
      $region11: #{tpu_custom_call.1} parent=5 // pred_region
        %s304 = ssub.s32 %s30, 1
        // Predicated region
        $region13: #{tpu_custom_call.1} parent=11 // pred_check
          %p305 = pneg %p171
        $region14: #{tpu_custom_call.1} parent=11 // pred_check_branch
          %307 = sbr.rel (%p305) target = $region16
        $region15: #{tpu_custom_call.1} parent=11 // pred_region
          %s309 = ssub.s32 512, 512
          %310 = vsyncadd [#allocation9], %s309
          %s311 = sshll.u32 [#allocation8], 4
          %s312 = int_to_ptr.vmem [resolvable:$true] %s311
          %317 = dma.hbm_to_vmem [thread:$0]  %s4, 512, %s312, [#allocation9], 128, 128, 8
        $region16: #{tpu_custom_call.1} parent=11 // pred_fallthru
          _
        // Predicated region
        $region17: #{tpu_custom_call.1} parent=11 // pred_check
          %p318 = pneg %p192
        $region18: #{tpu_custom_call.1} parent=11 // pred_check_branch
          %320 = sbr.rel (%p318) target = $region20
        $region19: #{tpu_custom_call.1} parent=11 // pred_region
          %s322 = ssub.s32 512, 512
          %323 = vsyncadd [#allocation9], %s322
          %s324 = sshll.u32 [#allocation10], 4
          %s325 = int_to_ptr.vmem [resolvable:$true] %s324
          %330 = dma.hbm_to_vmem [thread:$0]  %s5, 512, %s325, [#allocation9], 128, 128, 8
        $region20: #{tpu_custom_call.1} parent=11 // pred_fallthru
          _
        // Predicated region
        $region21: #{tpu_custom_call.1} parent=11 // pred_check
          %p331 = pneg %p213
        $region22: #{tpu_custom_call.1} parent=11 // pred_check_branch
          %333 = sbr.rel (%p331) target = $region24
        $region23: #{tpu_custom_call.1} parent=11 // pred_region
          %s335 = ssub.s32 512, 512
          %336 = vsyncadd [#allocation12], %s335
          %s337 = sshll.u32 [#allocation11], 4
          %s338 = int_to_ptr.vmem [resolvable:$true] %s337
          %343 = dma.hbm_to_vmem [thread:$0]  %s6, 512, %s338, [#allocation12], 128, 128, 8
        $region24: #{tpu_custom_call.1} parent=11 // pred_fallthru
          _
        // Predicated region
        $region25: #{tpu_custom_call.1} parent=11 // pred_check
          %p344 = pneg %p234
        $region26: #{tpu_custom_call.1} parent=11 // pred_check_branch
          %346 = sbr.rel (%p344) target = $region28
        $region27: #{tpu_custom_call.1} parent=11 // pred_region
          %s348 = ssub.s32 512, 512
          %349 = vsyncadd [#allocation12], %s348
          %s350 = sshll.u32 [#allocation13], 4
          %s351 = int_to_ptr.vmem [resolvable:$true] %s350
          %356 = dma.hbm_to_vmem [thread:$0]  %s7, 512, %s351, [#allocation12], 128, 128, 8
        $region28: #{tpu_custom_call.1} parent=11 // pred_fallthru
          _
      $region12: #{tpu_custom_call.1} parent=5 // pred_fallthru
        _
      %p357 = scmp.lt.s32.totalorder %s30, 2
      // Predicated region
      $region29: #{tpu_custom_call.1} parent=5 // pred_check
        %p358 = pneg %p357
      $region30: #{tpu_custom_call.1} parent=5 // pred_check_branch
        %360 = sbr.rel (%p358) target = $region32
      $region31: #{tpu_custom_call.1} parent=5 // pred_region
        // Predicated region
        $region33: #{tpu_custom_call.1} parent=31 // pred_check
          %p361 = pneg %p64
        $region34: #{tpu_custom_call.1} parent=31 // pred_check_branch
          %363 = sbr.rel (%p361) target = $region36
        $region35: #{tpu_custom_call.1} parent=31 // pred_region
          %s364 = sand.u32 %s54, 1
          %s365 = scalar_lea.sflag [#allocation3], %s364
          %s366 = sand.u32 %s54, 1
          %s367 = smul.addr %s366, 8
          %s368 = scalar_lea.vmem [#allocation2], %s367
          %s370 = ssub.s32 128, 128
          %371 = vsyncadd %s365, %s370
          %s372 = sadd.s32 %s38, %s37
          %s373 = smul.addr %s372, 128
          %s374 = scalar_lea.hbm %s0, %s373
          %s376 = sshll.u32 %s368, 4
          %s377 = int_to_ptr.vmem [resolvable:$true] %s376
          %379 = dma.hbm_to_vmem [thread:$0]  %s374, 128, %s377, %s365
        $region36: #{tpu_custom_call.1} parent=31 // pred_fallthru
          _
        // Predicated region
        $region37: #{tpu_custom_call.1} parent=31 // pred_check
          %p380 = pneg %p90
        $region38: #{tpu_custom_call.1} parent=31 // pred_check_branch
          %382 = sbr.rel (%p380) target = $region40
        $region39: #{tpu_custom_call.1} parent=31 // pred_region
          %s383 = sand.u32 %s30, 1
          %s384 = scalar_lea.sflag [#allocation6], %s383
          %s385 = sand.u32 %s80, 1
          %s386 = smul.addr %s385, 8
          %s387 = scalar_lea.vmem [#allocation5], %s386
          %s389 = ssub.s32 128, 128
          %390 = vsyncadd %s384, %s389
          %s391 = smul.addr %s37, 128
          %s392 = scalar_lea.hbm %s1, %s391
          %s394 = sshll.u32 %s387, 4
          %s395 = int_to_ptr.vmem [resolvable:$true] %s394
          %397 = dma.hbm_to_vmem [thread:$0]  %s392, 128, %s395, %s384
        $region40: #{tpu_custom_call.1} parent=31 // pred_fallthru
          _
        // Predicated region
        $region41: #{tpu_custom_call.1} parent=31 // pred_check
          %p398 = pneg %p116
        $region42: #{tpu_custom_call.1} parent=31 // pred_check_branch
          %400 = sbr.rel (%p398) target = $region44
        $region43: #{tpu_custom_call.1} parent=31 // pred_region
          %s401 = sand.u32 %s30, 1
          %s402 = scalar_lea.sflag [#allocation6], %s401
          %s403 = sand.u32 %s106, 1
          %s404 = smul.addr %s403, 8
          %s405 = scalar_lea.vmem [#allocation7], %s404
          %s407 = ssub.s32 128, 128
          %408 = vsyncadd %s402, %s407
          %s409 = smul.addr %s37, 128
          %s410 = scalar_lea.hbm %s2, %s409
          %s412 = sshll.u32 %s405, 4
          %s413 = int_to_ptr.vmem [resolvable:$true] %s412
          %415 = dma.hbm_to_vmem [thread:$0]  %s410, 128, %s413, %s402
        $region44: #{tpu_custom_call.1} parent=31 // pred_fallthru
          _
        // Predicated region
        $region45: #{tpu_custom_call.1} parent=31 // pred_check
          %p416 = pneg %p144
        $region46: #{tpu_custom_call.1} parent=31 // pred_check_branch
          %418 = sbr.rel (%p416) target = $region48
        $region47: #{tpu_custom_call.1} parent=31 // pred_region
          %p419 = scmp.lt.s32.totalorder %s37, 1
          %s420 = scalar_select %p419, %s37, 1
          %p421 = scmp.lt.s32.totalorder %s38, 0
          %s422 = scalar_select %p421, %s38, 0
          %s423 = sadd.s32 %s422, %s420
          %s424 = smul.addr %s423, 2
          %s425 = scalar_lea.vmem %s3, %s424
        $region48: #{tpu_custom_call.1} parent=31 // pred_fallthru
          _
      $region32: #{tpu_custom_call.1} parent=5 // pred_fallthru
        _
      %p426 = scmp.le.s32.totalorder 1, %s30
      %p427 = scmp.lt.s32.totalorder %s30, 3
      %p428 = pnand %p426, %p427
      %p429 = pneg %p428
      // Predicated region
      $region49: #{tpu_custom_call.1} parent=5 // pred_check
        _
      $region50: #{tpu_custom_call.1} parent=5 // pred_check_branch
        %431 = sbr.rel (%p428) target = $region52
      $region51: #{tpu_custom_call.1} parent=5 // pred_region
        %s432 = ssub.s32 %s30, 1
        %s433 = sand.u32 %s57, 1
        %s434 = scalar_lea.sflag [#allocation3], %s433
        %s435 = sand.u32 %s57, 1
        %s436 = smul.addr %s435, 8
        %s437 = scalar_lea.vmem [#allocation2], %s436
        // Predicated region
        $region53: #{tpu_custom_call.1} parent=51 // pred_check
          %p438 = pneg %p70
        $region54: #{tpu_custom_call.1} parent=51 // pred_check_branch
          %440 = sbr.rel (%p438) target = $region56
        $region55: #{tpu_custom_call.1} parent=51 // pred_region
          %441 = dma.done %s434, 128
        $region56: #{tpu_custom_call.1} parent=51 // pred_fallthru
          _
        %s442 = sand.u32 %s35, 1
        %s443 = scalar_lea.sflag [#allocation6], %s442
        %s444 = sand.u32 %s83, 1
        %s445 = smul.addr %s444, 8
        %s446 = scalar_lea.vmem [#allocation5], %s445
        // Predicated region
        $region57: #{tpu_custom_call.1} parent=51 // pred_check
          %p447 = pneg %p96
        $region58: #{tpu_custom_call.1} parent=51 // pred_check_branch
          %449 = sbr.rel (%p447) target = $region60
        $region59: #{tpu_custom_call.1} parent=51 // pred_region
          %450 = dma.done %s443, 128
        $region60: #{tpu_custom_call.1} parent=51 // pred_fallthru
          _
        %s451 = sand.u32 %s35, 1
        %s452 = scalar_lea.sflag [#allocation6], %s451
        %s453 = sand.u32 %s109, 1
        %s454 = smul.addr %s453, 8
        %s455 = scalar_lea.vmem [#allocation7], %s454
        // Predicated region
        $region61: #{tpu_custom_call.1} parent=51 // pred_check
          %p456 = pneg %p122
        $region62: #{tpu_custom_call.1} parent=51 // pred_check_branch
          %458 = sbr.rel (%p456) target = $region64
        $region63: #{tpu_custom_call.1} parent=51 // pred_region
          %459 = dma.done %s452, 128
        $region64: #{tpu_custom_call.1} parent=51 // pred_fallthru
          _
        // Predicated region
        $region65: #{tpu_custom_call.1} parent=51 // pred_check
          %p460 = pneg %p171
        $region66: #{tpu_custom_call.1} parent=51 // pred_check_branch
          %462 = sbr.rel (%p460) target = $region68
        $region67: #{tpu_custom_call.1} parent=51 // pred_region
          %463 = dma.done [#allocation9], 512
        $region68: #{tpu_custom_call.1} parent=51 // pred_fallthru
          _
        // Predicated region
        $region69: #{tpu_custom_call.1} parent=51 // pred_check
          %p464 = pneg %p192
        $region70: #{tpu_custom_call.1} parent=51 // pred_check_branch
          %466 = sbr.rel (%p464) target = $region72
        $region71: #{tpu_custom_call.1} parent=51 // pred_region
          %467 = dma.done [#allocation9], 512
        $region72: #{tpu_custom_call.1} parent=51 // pred_fallthru
          _
        // Predicated region
        $region73: #{tpu_custom_call.1} parent=51 // pred_check
          %p468 = pneg %p213
        $region74: #{tpu_custom_call.1} parent=51 // pred_check_branch
          %470 = sbr.rel (%p468) target = $region76
        $region75: #{tpu_custom_call.1} parent=51 // pred_region
          %471 = dma.done [#allocation12], 512
        $region76: #{tpu_custom_call.1} parent=51 // pred_fallthru
          _
        // Predicated region
        $region77: #{tpu_custom_call.1} parent=51 // pred_check
          %p472 = pneg %p234
        $region78: #{tpu_custom_call.1} parent=51 // pred_check_branch
          %474 = sbr.rel (%p472) target = $region80
        $region79: #{tpu_custom_call.1} parent=51 // pred_region
          %475 = dma.done [#allocation12], 512
        $region80: #{tpu_custom_call.1} parent=51 // pred_fallthru
          _
        %s476 = sand.u32 %s57, 1
        %s477 = scalar_lea.sflag [#allocation3], %s476
        %s478 = sand.u32 %s57, 1
        %s479 = smul.addr %s478, 8
        %s480 = scalar_lea.vmem [#allocation2], %s479
        %p481 = pneg %p70
        %p482 = pneg %p67
        %s483 = sand.u32 %s35, 1
        %s484 = scalar_lea.sflag [#allocation6], %s483
        %s485 = sand.u32 %s83, 1
        %s486 = smul.addr %s485, 8
        %s487 = scalar_lea.vmem [#allocation5], %s486
        %p488 = pneg %p96
        %p489 = pneg %p93
        %s490 = sand.u32 %s35, 1
        %s491 = scalar_lea.sflag [#allocation6], %s490
        %s492 = sand.u32 %s109, 1
        %s493 = smul.addr %s492, 8
        %s494 = scalar_lea.vmem [#allocation7], %s493
        %p495 = pneg %p122
        %p496 = pneg %p119
        %p497 = scmp.lt.s32.totalorder %s39, 1
        %s498 = scalar_select %p497, %s39, 1
        %p499 = scmp.lt.s32.totalorder %s40, 0
        %s500 = scalar_select %p499, %s40, 0
        %s501 = sadd.s32 %s500, %s498
        %s502 = smul.addr %s501, 2
        %s503 = scalar_lea.vmem %s3, %s502
        %p504 = pneg %p150
        %p505 = pneg %p147
        %p506 = pneg %p171
        %p507 = pneg %p168
        %p508 = pneg %p192
        %p509 = pneg %p189
        %p510 = pneg %p213
        %p511 = pneg %p210
        %p512 = pneg %p234
        %p513 = pneg %p231
        %p514 = pneg %p262
        %p515 = pneg %p259
        %s516 = sand.u32 %s249, 1
        %s517 = scalar_lea.sflag [#allocation4], %s516
        %s518 = sand.u32 %s249, 1
        %s519 = smul.addr %s518, 8
        %s520 = scalar_lea.vmem [#allocation14], %s519
        %p521 = pneg %p290
        %p522 = pneg %p287
        %s523 = sand.u32 %s277, 1
        %s524 = scalar_lea.sflag [#allocation16], %s523
        %s525 = sand.u32 %s277, 1
        %s526 = smul.addr %s525, 16
        %s527 = scalar_lea.vmem [#allocation15], %s526
        %p528 = scmp.lt.s32.totalorder %s39, 1
        %s529 = scalar_select %p528, %s39, 1
        %p530 = scmp.lt.s32.totalorder %s40, 0
        %s531 = scalar_select %p530, %s40, 0
        %s532 = sadd.s32 %s531, %s529
        %s533 = smul.addr %s532, 2
        %s534 = scalar_lea.vmem %s3, %s533
        %v535 = vld [vmem:[%s437] sm:$0xff]
        %v536 = vld [vmem:[%s446] sm:$0xff]
        %v537 = vld [vmem:[%s455] sm:$0xff]
        %v538 = vld [vmem:[#allocation8] sm:$0xff]
        %v539 = vld [vmem:[#allocation8 + $0x8] sm:$0xff]
        %v540 = vld [vmem:[#allocation8 + $0x10] sm:$0xff]
        %v541 = vld [vmem:[#allocation8 + $0x18] sm:$0xff]
        %vm542 = vcmask 261120
        %v544 = vsel %vm542, %v535, 0
        %546 = vmatprep.subr.mxu0 0.0
        %547 = vmatpush1.msra.mxu0 0.0
        %548 = vmatprep.subr.mxu0 0.0
        %549 = vmatpush1.msra.mxu0 0.0
        %550 = vmatprep.subr.mxu0 0.0
        %551 = vmatpush1.msra.mxu0 0.0
        %552 = vmatprep.subr.mxu0 0.0
        %553 = vmatpush1.msra.mxu0 0.0
        %554 = vmatprep.subr.mxu0 0.0
        %555 = vmatpush1.msra.mxu0 0.0
        %556 = vmatprep.subr.mxu0 0.0
        %557 = vmatpush1.msra.mxu0 0.0
        %558 = vmatprep.subr.mxu0 0.0
        %559 = vmatpush1.msra.mxu0 0.0
        %560 = vmatprep.subr.mxu0 0.0
        %561 = vmatpush1.msra.mxu0 0.0
        %562 = vmatprep.subr.mxu0 0.0
        %563 = vmatpush1.msra.mxu0 0.0
        %564 = vmatprep.subr.mxu0 0.0
        %565 = vmatpush1.msra.mxu0 0.0
        %566 = vmatprep.subr.mxu0 0.0
        %567 = vmatpush1.msra.mxu0 0.0
        %568 = vmatprep.subr.mxu0 0.0
        %569 = vmatpush1.msra.mxu0 0.0
        %570 = vmatprep.subr.mxu0 0.0
        %571 = vmatpush1.msra.mxu0 %v541
        %572 = vmatprep.subr.mxu0 0.0
        %573 = vmatpush1.msra.mxu0 %v540
        %574 = vmatprep.subr.mxu0 0.0
        %575 = vmatpush1.msra.mxu0 %v539
        %576 = vmatprep.subr.mxu0 0.0
        %577 = vmatpush1.msra.mxu0 %v538
        %578 = vmatprep.subr.mxu0 0.0
        %579 = vmatpush2.msra.mxu0 0.0
        %580 = vmatprep.subr.mxu0 0.0
        %581 = vmatpush2.msra.mxu0 0.0
        %582 = vmatprep.subr.mxu0 0.0
        %583 = vmatpush2.msra.mxu0 0.0
        %584 = vmatprep.subr.mxu0 0.0
        %585 = vmatpush2.msra.mxu0 0.0
        %586 = vmatprep.subr.mxu0 0.0
        %587 = vmatpush2.msra.mxu0 0.0
        %588 = vmatprep.subr.mxu0 0.0
        %589 = vmatpush2.msra.mxu0 0.0
        %590 = vmatprep.subr.mxu0 0.0
        %591 = vmatpush2.msra.mxu0 0.0
        %592 = vmatprep.subr.mxu0 0.0
        %593 = vmatpush2.msra.mxu0 0.0
        %594 = vmatprep.subr.mxu0 0.0
        %595 = vmatpush2.msra.mxu0 0.0
        %596 = vmatprep.subr.mxu0 0.0
        %597 = vmatpush2.msra.mxu0 0.0
        %598 = vmatprep.subr.mxu0 0.0
        %599 = vmatpush2.msra.mxu0 0.0
        %600 = vmatprep.subr.mxu0 0.0
        %601 = vmatpush2.msra.mxu0 0.0
        %602 = vmatprep.subr.mxu0 0.0
        %603 = vmatpush2.msra.mxu0 0.0
        %604 = vmatprep.subr.mxu0 0.0
        %605 = vmatpush2.msra.mxu0 0.0
        %606 = vmatprep.subr.mxu0 0.0
        %607 = vmatpush2.msra.mxu0 0.0
        %608 = vmatprep.subr.mxu0 0.0
        %609 = vmatpush2.msra.mxu0 0.0
        %610 = vmatprep.mubr.f32.mxu0 0.0
        %611 = vmatmul.mubr.f32.gmra.mxu0 %v544
        %v612 = vpop.f32.mrf.mxu0
        %v613 = vadd.f32 0.0, %v612
        %v614 = vpop.f32.mrf.mxu0
        %615 = vdwg.mxu0
        %v616 = vld [vmem:[#allocation10] sm:$0xff]
        %v617 = vld [vmem:[#allocation10 + $0x8] sm:$0xff]
        %v618 = vld [vmem:[#allocation10 + $0x10] sm:$0xff]
        %v619 = vld [vmem:[#allocation10 + $0x18] sm:$0xff]
        %v621 = vsel %vm542, %v536, 0
        %623 = vmatprep.subr.mxu0 0.0
        %624 = vmatpush1.msra.mxu0 0.0
        %625 = vmatprep.subr.mxu0 0.0
        %626 = vmatpush1.msra.mxu0 0.0
        %627 = vmatprep.subr.mxu0 0.0
        %628 = vmatpush1.msra.mxu0 0.0
        %629 = vmatprep.subr.mxu0 0.0
        %630 = vmatpush1.msra.mxu0 0.0
        %631 = vmatprep.subr.mxu0 0.0
        %632 = vmatpush1.msra.mxu0 0.0
        %633 = vmatprep.subr.mxu0 0.0
        %634 = vmatpush1.msra.mxu0 0.0
        %635 = vmatprep.subr.mxu0 0.0
        %636 = vmatpush1.msra.mxu0 0.0
        %637 = vmatprep.subr.mxu0 0.0
        %638 = vmatpush1.msra.mxu0 0.0
        %639 = vmatprep.subr.mxu0 0.0
        %640 = vmatpush1.msra.mxu0 0.0
        %641 = vmatprep.subr.mxu0 0.0
        %642 = vmatpush1.msra.mxu0 0.0
        %643 = vmatprep.subr.mxu0 0.0
        %644 = vmatpush1.msra.mxu0 0.0
        %645 = vmatprep.subr.mxu0 0.0
        %646 = vmatpush1.msra.mxu0 0.0
        %647 = vmatprep.subr.mxu0 0.0
        %648 = vmatpush1.msra.mxu0 %v619
        %649 = vmatprep.subr.mxu0 0.0
        %650 = vmatpush1.msra.mxu0 %v618
        %651 = vmatprep.subr.mxu0 0.0
        %652 = vmatpush1.msra.mxu0 %v617
        %653 = vmatprep.subr.mxu0 0.0
        %654 = vmatpush1.msra.mxu0 %v616
        %655 = vmatprep.subr.mxu0 0.0
        %656 = vmatpush2.msra.mxu0 0.0
        %657 = vmatprep.subr.mxu0 0.0
        %658 = vmatpush2.msra.mxu0 0.0
        %659 = vmatprep.subr.mxu0 0.0
        %660 = vmatpush2.msra.mxu0 0.0
        %661 = vmatprep.subr.mxu0 0.0
        %662 = vmatpush2.msra.mxu0 0.0
        %663 = vmatprep.subr.mxu0 0.0
        %664 = vmatpush2.msra.mxu0 0.0
        %665 = vmatprep.subr.mxu0 0.0
        %666 = vmatpush2.msra.mxu0 0.0
        %667 = vmatprep.subr.mxu0 0.0
        %668 = vmatpush2.msra.mxu0 0.0
        %669 = vmatprep.subr.mxu0 0.0
        %670 = vmatpush2.msra.mxu0 0.0
        %671 = vmatprep.subr.mxu0 0.0
        %672 = vmatpush2.msra.mxu0 0.0
        %673 = vmatprep.subr.mxu0 0.0
        %674 = vmatpush2.msra.mxu0 0.0
        %675 = vmatprep.subr.mxu0 0.0
        %676 = vmatpush2.msra.mxu0 0.0
        %677 = vmatprep.subr.mxu0 0.0
        %678 = vmatpush2.msra.mxu0 0.0
        %679 = vmatprep.subr.mxu0 0.0
        %680 = vmatpush2.msra.mxu0 0.0
        %681 = vmatprep.subr.mxu0 0.0
        %682 = vmatpush2.msra.mxu0 0.0
        %683 = vmatprep.subr.mxu0 0.0
        %684 = vmatpush2.msra.mxu0 0.0
        %685 = vmatprep.subr.mxu0 0.0
        %686 = vmatpush2.msra.mxu0 0.0
        %687 = vmatprep.mubr.f32.mxu0 0.0
        %688 = vmatmul.mubr.f32.gmra.mxu0 %v621
        %v689 = vpop.f32.mrf.mxu0
        %v690 = vadd.f32 0.0, %v689
        %v691 = vpop.f32.mrf.mxu0
        %692 = vdwg.mxu0
        %v693 = vld [vmem:[#allocation11] sm:$0xff]
        %v694 = vld [vmem:[#allocation11 + $0x8] sm:$0xff]
        %v695 = vld [vmem:[#allocation11 + $0x10] sm:$0xff]
        %v696 = vld [vmem:[#allocation11 + $0x18] sm:$0xff]
        %v698 = vsel %vm542, %v537, 0
        %700 = vmatprep.subr.mxu0 0.0
        %701 = vmatpush1.msra.mxu0 0.0
        %702 = vmatprep.subr.mxu0 0.0
        %703 = vmatpush1.msra.mxu0 0.0
        %704 = vmatprep.subr.mxu0 0.0
        %705 = vmatpush1.msra.mxu0 0.0
        %706 = vmatprep.subr.mxu0 0.0
        %707 = vmatpush1.msra.mxu0 0.0
        %708 = vmatprep.subr.mxu0 0.0
        %709 = vmatpush1.msra.mxu0 0.0
        %710 = vmatprep.subr.mxu0 0.0
        %711 = vmatpush1.msra.mxu0 0.0
        %712 = vmatprep.subr.mxu0 0.0
        %713 = vmatpush1.msra.mxu0 0.0
        %714 = vmatprep.subr.mxu0 0.0
        %715 = vmatpush1.msra.mxu0 0.0
        %716 = vmatprep.subr.mxu0 0.0
        %717 = vmatpush1.msra.mxu0 0.0
        %718 = vmatprep.subr.mxu0 0.0
        %719 = vmatpush1.msra.mxu0 0.0
        %720 = vmatprep.subr.mxu0 0.0
        %721 = vmatpush1.msra.mxu0 0.0
        %722 = vmatprep.subr.mxu0 0.0
        %723 = vmatpush1.msra.mxu0 0.0
        %724 = vmatprep.subr.mxu0 0.0
        %725 = vmatpush1.msra.mxu0 %v696
        %726 = vmatprep.subr.mxu0 0.0
        %727 = vmatpush1.msra.mxu0 %v695
        %728 = vmatprep.subr.mxu0 0.0
        %729 = vmatpush1.msra.mxu0 %v694
        %730 = vmatprep.subr.mxu0 0.0
        %731 = vmatpush1.msra.mxu0 %v693
        %732 = vmatprep.subr.mxu0 0.0
        %733 = vmatpush2.msra.mxu0 0.0
        %734 = vmatprep.subr.mxu0 0.0
        %735 = vmatpush2.msra.mxu0 0.0
        %736 = vmatprep.subr.mxu0 0.0
        %737 = vmatpush2.msra.mxu0 0.0
        %738 = vmatprep.subr.mxu0 0.0
        %739 = vmatpush2.msra.mxu0 0.0
        %740 = vmatprep.subr.mxu0 0.0
        %741 = vmatpush2.msra.mxu0 0.0
        %742 = vmatprep.subr.mxu0 0.0
        %743 = vmatpush2.msra.mxu0 0.0
        %744 = vmatprep.subr.mxu0 0.0
        %745 = vmatpush2.msra.mxu0 0.0
        %746 = vmatprep.subr.mxu0 0.0
        %747 = vmatpush2.msra.mxu0 0.0
        %748 = vmatprep.subr.mxu0 0.0
        %749 = vmatpush2.msra.mxu0 0.0
        %750 = vmatprep.subr.mxu0 0.0
        %751 = vmatpush2.msra.mxu0 0.0
        %752 = vmatprep.subr.mxu0 0.0
        %753 = vmatpush2.msra.mxu0 0.0
        %754 = vmatprep.subr.mxu0 0.0
        %755 = vmatpush2.msra.mxu0 0.0
        %756 = vmatprep.subr.mxu0 0.0
        %757 = vmatpush2.msra.mxu0 0.0
        %758 = vmatprep.subr.mxu0 0.0
        %759 = vmatpush2.msra.mxu0 0.0
        %760 = vmatprep.subr.mxu0 0.0
        %761 = vmatpush2.msra.mxu0 0.0
        %762 = vmatprep.subr.mxu0 0.0
        %763 = vmatpush2.msra.mxu0 0.0
        %764 = vmatprep.mubr.f32.mxu0 0.0
        %765 = vmatmul.mubr.f32.gmra.mxu0 %v698
        %v766 = vpop.f32.mrf.mxu0
        %v767 = vadd.f32 0.0, %v766
        %v768 = vpop.f32.mrf.mxu0
        %769 = vdwg.mxu0
        %v770 = vmul.f32 %v613, 0.25
        %v771 = vld [vmem:[%s534] sm:$0x3]
        %v772 = vunpack.c.0.s8 %v771
        %vm773 = vcmp.ne.s32.totalorder %v772, 0
        %vm774 = vcmask 130048
        %v776 = vsel %vm774, %v770, 0
        %v779 = vsel %vm774, %v690, 0
        %781 = vmatprep.subr.mxu0 0.0
        %782 = vmatpush1.xpose.msra.mxu0 0.0
        %783 = vmatprep.subr.mxu0 0.0
        %784 = vmatpush1.xpose.msra.mxu0 0.0
        %785 = vmatprep.subr.mxu0 0.0
        %786 = vmatpush1.xpose.msra.mxu0 0.0
        %787 = vmatprep.subr.mxu0 0.0
        %788 = vmatpush1.xpose.msra.mxu0 0.0
        %789 = vmatprep.subr.mxu0 0.0
        %790 = vmatpush1.xpose.msra.mxu0 0.0
        %791 = vmatprep.subr.mxu0 0.0
        %792 = vmatpush1.xpose.msra.mxu0 0.0
        %793 = vmatprep.subr.mxu0 0.0
        %794 = vmatpush1.xpose.msra.mxu0 0.0
        %795 = vmatprep.subr.mxu0 0.0
        %796 = vmatpush1.xpose.msra.mxu0 0.0
        %797 = vmatprep.subr.mxu0 0.0
        %798 = vmatpush1.xpose.msra.mxu0 0.0
        %799 = vmatprep.subr.mxu0 0.0
        %800 = vmatpush1.xpose.msra.mxu0 0.0
        %801 = vmatprep.subr.mxu0 0.0
        %802 = vmatpush1.xpose.msra.mxu0 0.0
        %803 = vmatprep.subr.mxu0 0.0
        %804 = vmatpush1.xpose.msra.mxu0 0.0
        %805 = vmatprep.subr.mxu0 0.0
        %806 = vmatpush1.xpose.msra.mxu0 0.0
        %807 = vmatprep.subr.mxu0 0.0
        %808 = vmatpush1.xpose.msra.mxu0 0.0
        %809 = vmatprep.subr.mxu0 0.0
        %810 = vmatpush1.xpose.msra.mxu0 0.0
        %811 = vmatprep.subr.mxu0 0.0
        %812 = vmatpush1.xpose.msra.mxu0 %v779
        %813 = vmatprep.subr.mxu0 0.0
        %814 = vmatpush2.xpose.msra.mxu0 0.0
        %815 = vmatprep.subr.mxu0 0.0
        %816 = vmatpush2.xpose.msra.mxu0 0.0
        %817 = vmatprep.subr.mxu0 0.0
        %818 = vmatpush2.xpose.msra.mxu0 0.0
        %819 = vmatprep.subr.mxu0 0.0
        %820 = vmatpush2.xpose.msra.mxu0 0.0
        %821 = vmatprep.subr.mxu0 0.0
        %822 = vmatpush2.xpose.msra.mxu0 0.0
        %823 = vmatprep.subr.mxu0 0.0
        %824 = vmatpush2.xpose.msra.mxu0 0.0
        %825 = vmatprep.subr.mxu0 0.0
        %826 = vmatpush2.xpose.msra.mxu0 0.0
        %827 = vmatprep.subr.mxu0 0.0
        %828 = vmatpush2.xpose.msra.mxu0 0.0
        %829 = vmatprep.subr.mxu0 0.0
        %830 = vmatpush2.xpose.msra.mxu0 0.0
        %831 = vmatprep.subr.mxu0 0.0
        %832 = vmatpush2.xpose.msra.mxu0 0.0
        %833 = vmatprep.subr.mxu0 0.0
        %834 = vmatpush2.xpose.msra.mxu0 0.0
        %835 = vmatprep.subr.mxu0 0.0
        %836 = vmatpush2.xpose.msra.mxu0 0.0
        %837 = vmatprep.subr.mxu0 0.0
        %838 = vmatpush2.xpose.msra.mxu0 0.0
        %839 = vmatprep.subr.mxu0 0.0
        %840 = vmatpush2.xpose.msra.mxu0 0.0
        %841 = vmatprep.subr.mxu0 0.0
        %842 = vmatpush2.xpose.msra.mxu0 0.0
        %843 = vmatprep.subr.mxu0 0.0
        %844 = vmatpush2.xpose.msra.mxu0 0.0
        %845 = vmatprep.mubr.f32.mxu0 0.0
        %846 = vmatmul.mubr.f32.gmra.mxu0 %v776
        %v847 = vpop.f32.mrf.mxu0
        %v848 = vadd.f32 0.0, %v847
        %v849 = vpop.f32.mrf.mxu0
        %850 = vdwg.mxu0
        %v851 = vsel %vm773, -3.4028235e+38, %v848
        %vm852 = vcmask 64512
        %v853 = vsel %vm852, %v851, -inf
        %854 = vmax.xlane.f32.xlu0 %v853
        %v855 = vpop.xlane.xlu0 %854
        %v856 = vsub.f32 %v851, %v855
        %v857 = vmul.f32 %v856, 1.442695
        %v858 = vpow.pop %v857
        %v859 = vsel %vm852, %v858, 0.0
        %860 = vadd.xlane.f32.xlu0 %v859
        %v861 = vpop.xlane.xlu0 %860
        %v862 = vrcp.pop %v861
        %v863 = vmul.f32 %v858, %v862
        %864 = vst.msk [vmem:[%s527] sm:$0xff] %vm852, %v863
        %v866 = vsel %vm852, %v863, 0
        %868 = vmatprep.subr.mxu0 0.0
        %869 = vmatpush1.msra.mxu0 0.0
        %870 = vmatprep.subr.mxu0 0.0
        %871 = vmatpush1.msra.mxu0 0.0
        %872 = vmatprep.subr.mxu0 0.0
        %873 = vmatpush1.msra.mxu0 0.0
        %874 = vmatprep.subr.mxu0 0.0
        %875 = vmatpush1.msra.mxu0 0.0
        %876 = vmatprep.subr.mxu0 0.0
        %877 = vmatpush1.msra.mxu0 0.0
        %878 = vmatprep.subr.mxu0 0.0
        %879 = vmatpush1.msra.mxu0 0.0
        %880 = vmatprep.subr.mxu0 0.0
        %881 = vmatpush1.msra.mxu0 0.0
        %882 = vmatprep.subr.mxu0 0.0
        %883 = vmatpush1.msra.mxu0 0.0
        %884 = vmatprep.subr.mxu0 0.0
        %885 = vmatpush1.msra.mxu0 0.0
        %886 = vmatprep.subr.mxu0 0.0
        %887 = vmatpush1.msra.mxu0 0.0
        %888 = vmatprep.subr.mxu0 0.0
        %889 = vmatpush1.msra.mxu0 0.0
        %890 = vmatprep.subr.mxu0 0.0
        %891 = vmatpush1.msra.mxu0 0.0
        %892 = vmatprep.subr.mxu0 0.0
        %893 = vmatpush1.msra.mxu0 0.0
        %894 = vmatprep.subr.mxu0 0.0
        %895 = vmatpush1.msra.mxu0 0.0
        %896 = vmatprep.subr.mxu0 0.0
        %897 = vmatpush1.msra.mxu0 0.0
        %898 = vmatprep.subr.mxu0 0.0
        %899 = vmatpush1.msra.mxu0 %v767
        %900 = vmatprep.subr.mxu0 0.0
        %901 = vmatpush2.msra.mxu0 0.0
        %902 = vmatprep.subr.mxu0 0.0
        %903 = vmatpush2.msra.mxu0 0.0
        %904 = vmatprep.subr.mxu0 0.0
        %905 = vmatpush2.msra.mxu0 0.0
        %906 = vmatprep.subr.mxu0 0.0
        %907 = vmatpush2.msra.mxu0 0.0
        %908 = vmatprep.subr.mxu0 0.0
        %909 = vmatpush2.msra.mxu0 0.0
        %910 = vmatprep.subr.mxu0 0.0
        %911 = vmatpush2.msra.mxu0 0.0
        %912 = vmatprep.subr.mxu0 0.0
        %913 = vmatpush2.msra.mxu0 0.0
        %914 = vmatprep.subr.mxu0 0.0
        %915 = vmatpush2.msra.mxu0 0.0
        %916 = vmatprep.subr.mxu0 0.0
        %917 = vmatpush2.msra.mxu0 0.0
        %918 = vmatprep.subr.mxu0 0.0
        %919 = vmatpush2.msra.mxu0 0.0
        %920 = vmatprep.subr.mxu0 0.0
        %921 = vmatpush2.msra.mxu0 0.0
        %922 = vmatprep.subr.mxu0 0.0
        %923 = vmatpush2.msra.mxu0 0.0
        %924 = vmatprep.subr.mxu0 0.0
        %925 = vmatpush2.msra.mxu0 0.0
        %926 = vmatprep.subr.mxu0 0.0
        %927 = vmatpush2.msra.mxu0 0.0
        %928 = vmatprep.subr.mxu0 0.0
        %929 = vmatpush2.msra.mxu0 0.0
        %930 = vmatprep.subr.mxu0 0.0
        %931 = vmatpush2.msra.mxu0 0.0
        %932 = vmatprep.mubr.f32.mxu0 0.0
        %933 = vmatmul.mubr.f32.gmra.mxu0 %v866
        %v934 = vpop.f32.mrf.mxu0
        %v935 = vadd.f32 0.0, %v934
        %v936 = vpop.f32.mrf.mxu0
        %937 = vdwg.mxu0
        %938 = vrot.lane.b32.xlu0 %v770, 112
        %v939 = vpop.permute.xlu0 %938
        %940 = vrot.lane.b32.xlu0 %v690, 112
        %v941 = vpop.permute.xlu0 %940
        %v942 = vsel %vm774, %v939, 0
        %v944 = vsel %vm774, %v941, 0
        %946 = vmatprep.subr.mxu0 0.0
        %947 = vmatpush1.xpose.msra.mxu0 0.0
        %948 = vmatprep.subr.mxu0 0.0
        %949 = vmatpush1.xpose.msra.mxu0 0.0
        %950 = vmatprep.subr.mxu0 0.0
        %951 = vmatpush1.xpose.msra.mxu0 0.0
        %952 = vmatprep.subr.mxu0 0.0
        %953 = vmatpush1.xpose.msra.mxu0 0.0
        %954 = vmatprep.subr.mxu0 0.0
        %955 = vmatpush1.xpose.msra.mxu0 0.0
        %956 = vmatprep.subr.mxu0 0.0
        %957 = vmatpush1.xpose.msra.mxu0 0.0
        %958 = vmatprep.subr.mxu0 0.0
        %959 = vmatpush1.xpose.msra.mxu0 0.0
        %960 = vmatprep.subr.mxu0 0.0
        %961 = vmatpush1.xpose.msra.mxu0 0.0
        %962 = vmatprep.subr.mxu0 0.0
        %963 = vmatpush1.xpose.msra.mxu0 0.0
        %964 = vmatprep.subr.mxu0 0.0
        %965 = vmatpush1.xpose.msra.mxu0 0.0
        %966 = vmatprep.subr.mxu0 0.0
        %967 = vmatpush1.xpose.msra.mxu0 0.0
        %968 = vmatprep.subr.mxu0 0.0
        %969 = vmatpush1.xpose.msra.mxu0 0.0
        %970 = vmatprep.subr.mxu0 0.0
        %971 = vmatpush1.xpose.msra.mxu0 0.0
        %972 = vmatprep.subr.mxu0 0.0
        %973 = vmatpush1.xpose.msra.mxu0 0.0
        %974 = vmatprep.subr.mxu0 0.0
        %975 = vmatpush1.xpose.msra.mxu0 0.0
        %976 = vmatprep.subr.mxu0 0.0
        %977 = vmatpush1.xpose.msra.mxu0 %v944
        %978 = vmatprep.subr.mxu0 0.0
        %979 = vmatpush2.xpose.msra.mxu0 0.0
        %980 = vmatprep.subr.mxu0 0.0
        %981 = vmatpush2.xpose.msra.mxu0 0.0
        %982 = vmatprep.subr.mxu0 0.0
        %983 = vmatpush2.xpose.msra.mxu0 0.0
        %984 = vmatprep.subr.mxu0 0.0
        %985 = vmatpush2.xpose.msra.mxu0 0.0
        %986 = vmatprep.subr.mxu0 0.0
        %987 = vmatpush2.xpose.msra.mxu0 0.0
        %988 = vmatprep.subr.mxu0 0.0
        %989 = vmatpush2.xpose.msra.mxu0 0.0
        %990 = vmatprep.subr.mxu0 0.0
        %991 = vmatpush2.xpose.msra.mxu0 0.0
        %992 = vmatprep.subr.mxu0 0.0
        %993 = vmatpush2.xpose.msra.mxu0 0.0
        %994 = vmatprep.subr.mxu0 0.0
        %995 = vmatpush2.xpose.msra.mxu0 0.0
        %996 = vmatprep.subr.mxu0 0.0
        %997 = vmatpush2.xpose.msra.mxu0 0.0
        %998 = vmatprep.subr.mxu0 0.0
        %999 = vmatpush2.xpose.msra.mxu0 0.0
        %1000 = vmatprep.subr.mxu0 0.0
        %1001 = vmatpush2.xpose.msra.mxu0 0.0
        %1002 = vmatprep.subr.mxu0 0.0
        %1003 = vmatpush2.xpose.msra.mxu0 0.0
        %1004 = vmatprep.subr.mxu0 0.0
        %1005 = vmatpush2.xpose.msra.mxu0 0.0
        %1006 = vmatprep.subr.mxu0 0.0
        %1007 = vmatpush2.xpose.msra.mxu0 0.0
        %1008 = vmatprep.subr.mxu0 0.0
        %1009 = vmatpush2.xpose.msra.mxu0 0.0
        %1010 = vmatprep.mubr.f32.mxu0 0.0
        %1011 = vmatmul.mubr.f32.gmra.mxu0 %v942
        %v1012 = vpop.f32.mrf.mxu0
        %v1013 = vadd.f32 0.0, %v1012
        %v1014 = vpop.f32.mrf.mxu0
        %1015 = vdwg.mxu0
        %v1016 = vsel %vm773, -3.4028235e+38, %v1013
        %v1017 = vsel %vm852, %v1016, -inf
        %1018 = vmax.xlane.f32.xlu0 %v1017
        %v1019 = vpop.xlane.xlu0 %1018
        %v1020 = vsub.f32 %v1016, %v1019
        %v1021 = vmul.f32 %v1020, 1.442695
        %v1022 = vpow.pop %v1021
        %v1023 = vsel %vm852, %v1022, 0.0
        %1024 = vadd.xlane.f32.xlu0 %v1023
        %v1025 = vpop.xlane.xlu0 %1024
        %v1026 = vrcp.pop %v1025
        %v1027 = vmul.f32 %v1022, %v1026
        %s1028 = scalar_lea.vmem %s527, 8 [#allocation15]
        %1029 = vst.msk [vmem:[%s1028] sm:$0xff] %vm852, %v1027
        %1031 = vrot.lane.b32.xlu0 %v767, 112
        %v1032 = vpop.permute.xlu0 %1031
        %v1035 = vsel %vm852, %v1027, 0
        %1037 = vmatprep.subr.mxu0 0.0
        %1038 = vmatpush1.msra.mxu0 0.0
        %1039 = vmatprep.subr.mxu0 0.0
        %1040 = vmatpush1.msra.mxu0 0.0
        %1041 = vmatprep.subr.mxu0 0.0
        %1042 = vmatpush1.msra.mxu0 0.0
        %1043 = vmatprep.subr.mxu0 0.0
        %1044 = vmatpush1.msra.mxu0 0.0
        %1045 = vmatprep.subr.mxu0 0.0
        %1046 = vmatpush1.msra.mxu0 0.0
        %1047 = vmatprep.subr.mxu0 0.0
        %1048 = vmatpush1.msra.mxu0 0.0
        %1049 = vmatprep.subr.mxu0 0.0
        %1050 = vmatpush1.msra.mxu0 0.0
        %1051 = vmatprep.subr.mxu0 0.0
        %1052 = vmatpush1.msra.mxu0 0.0
        %1053 = vmatprep.subr.mxu0 0.0
        %1054 = vmatpush1.msra.mxu0 0.0
        %1055 = vmatprep.subr.mxu0 0.0
        %1056 = vmatpush1.msra.mxu0 0.0
        %1057 = vmatprep.subr.mxu0 0.0
        %1058 = vmatpush1.msra.mxu0 0.0
        %1059 = vmatprep.subr.mxu0 0.0
        %1060 = vmatpush1.msra.mxu0 0.0
        %1061 = vmatprep.subr.mxu0 0.0
        %1062 = vmatpush1.msra.mxu0 0.0
        %1063 = vmatprep.subr.mxu0 0.0
        %1064 = vmatpush1.msra.mxu0 0.0
        %1065 = vmatprep.subr.mxu0 0.0
        %1066 = vmatpush1.msra.mxu0 0.0
        %1067 = vmatprep.subr.mxu0 0.0
        %1068 = vmatpush1.msra.mxu0 %v1032
        %1069 = vmatprep.subr.mxu0 0.0
        %1070 = vmatpush2.msra.mxu0 0.0
        %1071 = vmatprep.subr.mxu0 0.0
        %1072 = vmatpush2.msra.mxu0 0.0
        %1073 = vmatprep.subr.mxu0 0.0
        %1074 = vmatpush2.msra.mxu0 0.0
        %1075 = vmatprep.subr.mxu0 0.0
        %1076 = vmatpush2.msra.mxu0 0.0
        %1077 = vmatprep.subr.mxu0 0.0
        %1078 = vmatpush2.msra.mxu0 0.0
        %1079 = vmatprep.subr.mxu0 0.0
        %1080 = vmatpush2.msra.mxu0 0.0
        %1081 = vmatprep.subr.mxu0 0.0
        %1082 = vmatpush2.msra.mxu0 0.0
        %1083 = vmatprep.subr.mxu0 0.0
        %1084 = vmatpush2.msra.mxu0 0.0
        %1085 = vmatprep.subr.mxu0 0.0
        %1086 = vmatpush2.msra.mxu0 0.0
        %1087 = vmatprep.subr.mxu0 0.0
        %1088 = vmatpush2.msra.mxu0 0.0
        %1089 = vmatprep.subr.mxu0 0.0
        %1090 = vmatpush2.msra.mxu0 0.0
        %1091 = vmatprep.subr.mxu0 0.0
        %1092 = vmatpush2.msra.mxu0 0.0
        %1093 = vmatprep.subr.mxu0 0.0
        %1094 = vmatpush2.msra.mxu0 0.0
        %1095 = vmatprep.subr.mxu0 0.0
        %1096 = vmatpush2.msra.mxu0 0.0
        %1097 = vmatprep.subr.mxu0 0.0
        %1098 = vmatpush2.msra.mxu0 0.0
        %1099 = vmatprep.subr.mxu0 0.0
        %1100 = vmatpush2.msra.mxu0 0.0
        %1101 = vmatprep.mubr.f32.mxu0 0.0
        %1102 = vmatmul.mubr.f32.gmra.mxu0 %v1035
        %v1103 = vpop.f32.mrf.mxu0
        %v1104 = vadd.f32 0.0, %v1103
        %v1105 = vpop.f32.mrf.mxu0
        %1106 = vdwg.mxu0
        %1108 = vrot.lane.b32.xlu0 %v1104, 16
        %v1109 = vpop.permute.xlu0 %1108
        %v1111 = vsel %vm774, %v935, %v1109
        %v1112 = vld [vmem:[#allocation13] sm:$0xff]
        %v1113 = vld [vmem:[#allocation13 + $0x8] sm:$0xff]
        %v1114 = vld [vmem:[#allocation13 + $0x10] sm:$0xff]
        %v1115 = vld [vmem:[#allocation13 + $0x18] sm:$0xff]
        %v1117 = vsel %vm542, %v1111, 0
        %1119 = vmatprep.subr.mxu0 0.0
        %1120 = vmatpush1.msra.mxu0 0.0
        %1121 = vmatprep.subr.mxu0 0.0
        %1122 = vmatpush1.msra.mxu0 0.0
        %1123 = vmatprep.subr.mxu0 0.0
        %1124 = vmatpush1.msra.mxu0 0.0
        %1125 = vmatprep.subr.mxu0 0.0
        %1126 = vmatpush1.msra.mxu0 0.0
        %1127 = vmatprep.subr.mxu0 0.0
        %1128 = vmatpush1.msra.mxu0 0.0
        %1129 = vmatprep.subr.mxu0 0.0
        %1130 = vmatpush1.msra.mxu0 0.0
        %1131 = vmatprep.subr.mxu0 0.0
        %1132 = vmatpush1.msra.mxu0 0.0
        %1133 = vmatprep.subr.mxu0 0.0
        %1134 = vmatpush1.msra.mxu0 0.0
        %1135 = vmatprep.subr.mxu0 0.0
        %1136 = vmatpush1.msra.mxu0 0.0
        %1137 = vmatprep.subr.mxu0 0.0
        %1138 = vmatpush1.msra.mxu0 0.0
        %1139 = vmatprep.subr.mxu0 0.0
        %1140 = vmatpush1.msra.mxu0 0.0
        %1141 = vmatprep.subr.mxu0 0.0
        %1142 = vmatpush1.msra.mxu0 0.0
        %1143 = vmatprep.subr.mxu0 0.0
        %1144 = vmatpush1.msra.mxu0 %v1115
        %1145 = vmatprep.subr.mxu0 0.0
        %1146 = vmatpush1.msra.mxu0 %v1114
        %1147 = vmatprep.subr.mxu0 0.0
        %1148 = vmatpush1.msra.mxu0 %v1113
        %1149 = vmatprep.subr.mxu0 0.0
        %1150 = vmatpush1.msra.mxu0 %v1112
        %1151 = vmatprep.subr.mxu0 0.0
        %1152 = vmatpush2.msra.mxu0 0.0
        %1153 = vmatprep.subr.mxu0 0.0
        %1154 = vmatpush2.msra.mxu0 0.0
        %1155 = vmatprep.subr.mxu0 0.0
        %1156 = vmatpush2.msra.mxu0 0.0
        %1157 = vmatprep.subr.mxu0 0.0
        %1158 = vmatpush2.msra.mxu0 0.0
        %1159 = vmatprep.subr.mxu0 0.0
        %1160 = vmatpush2.msra.mxu0 0.0
        %1161 = vmatprep.subr.mxu0 0.0
        %1162 = vmatpush2.msra.mxu0 0.0
        %1163 = vmatprep.subr.mxu0 0.0
        %1164 = vmatpush2.msra.mxu0 0.0
        %1165 = vmatprep.subr.mxu0 0.0
        %1166 = vmatpush2.msra.mxu0 0.0
        %1167 = vmatprep.subr.mxu0 0.0
        %1168 = vmatpush2.msra.mxu0 0.0
        %1169 = vmatprep.subr.mxu0 0.0
        %1170 = vmatpush2.msra.mxu0 0.0
        %1171 = vmatprep.subr.mxu0 0.0
        %1172 = vmatpush2.msra.mxu0 0.0
        %1173 = vmatprep.subr.mxu0 0.0
        %1174 = vmatpush2.msra.mxu0 0.0
        %1175 = vmatprep.subr.mxu0 0.0
        %1176 = vmatpush2.msra.mxu0 0.0
        %1177 = vmatprep.subr.mxu0 0.0
        %1178 = vmatpush2.msra.mxu0 0.0
        %1179 = vmatprep.subr.mxu0 0.0
        %1180 = vmatpush2.msra.mxu0 0.0
        %1181 = vmatprep.subr.mxu0 0.0
        %1182 = vmatpush2.msra.mxu0 0.0
        %1183 = vmatprep.mubr.f32.mxu0 0.0
        %1184 = vmatmul.mubr.f32.gmra.mxu0 %v1117
        %v1185 = vpop.f32.mrf.mxu0
        %v1186 = vadd.f32 0.0, %v1185
        %v1187 = vpop.f32.mrf.mxu0
        %1188 = vdwg.mxu0
        %1189 = vst.msk [vmem:[%s520] sm:$0xff] %vm542, %v1186
        %s1190 = sand.u32 %s249, 1
        %s1191 = scalar_lea.sflag [#allocation4], %s1190
        %s1192 = sand.u32 %s249, 1
        %s1193 = smul.addr %s1192, 8
        %s1194 = scalar_lea.vmem [#allocation14], %s1193
        %s1195 = sand.u32 %s277, 1
        %s1196 = scalar_lea.sflag [#allocation16], %s1195
        %s1197 = sand.u32 %s277, 1
        %s1198 = smul.addr %s1197, 16
        %s1199 = scalar_lea.vmem [#allocation15], %s1198
        // Predicated region
        $region81: #{tpu_custom_call.1} parent=51 // pred_check
          %p1200 = pneg %p259
        $region82: #{tpu_custom_call.1} parent=51 // pred_check_branch
          %1202 = sbr.rel (%p1200) target = $region84
        $region83: #{tpu_custom_call.1} parent=51 // pred_region
          %s1204 = ssub.s32 128, 128
          %1205 = vsyncadd %s1191, %s1204
          %s1206 = sadd.s32 %s40, %s39
          %s1207 = smul.addr %s1206, 128
          %s1208 = scalar_lea.hbm %s8, %s1207
          %s1210 = sshll.u32 %s1194, 4
          %s1211 = int_to_ptr.vmem [resolvable:$true] %s1210
          %1213 = dma.vmem_to_hbm [thread:$0]  %s1211, 128, %s1208, %s1191
        $region84: #{tpu_custom_call.1} parent=51 // pred_fallthru
          _
        // Predicated region
        $region85: #{tpu_custom_call.1} parent=51 // pred_check
          %p1214 = pneg %p287
        $region86: #{tpu_custom_call.1} parent=51 // pred_check_branch
          %1216 = sbr.rel (%p1214) target = $region88
        $region87: #{tpu_custom_call.1} parent=51 // pred_region
          %s1218 = ssub.s32 256, 256
          %1219 = vsyncadd %s1196, %s1218
          %s1220 = smul.addr %s39, 2
          %s1221 = sadd.s32 %s40, %s1220
          %s1222 = smul.addr %s1221, 128
          %s1223 = scalar_lea.hbm %s9, %s1222
          %s1224 = sshll.u32 %s1199, 4
          %s1225 = int_to_ptr.vmem [resolvable:$true] %s1224
          %1230 = dma.vmem_to_hbm [thread:$0]  %s1225, 256, %s1223, %s1196, 128, 128, 8
        $region88: #{tpu_custom_call.1} parent=51 // pred_fallthru
          _
      $region52: #{tpu_custom_call.1} parent=5 // pred_fallthru
        _
      %p1231 = scmp.le.s32.totalorder 2, %s30
      // Predicated region
      $region89: #{tpu_custom_call.1} parent=5 // pred_check
        %p1232 = pneg %p1231
      $region90: #{tpu_custom_call.1} parent=5 // pred_check_branch
        %1234 = sbr.rel (%p1232) target = $region92
      $region91: #{tpu_custom_call.1} parent=5 // pred_region
        %s1235 = ssub.s32 %s30, 2
        // Predicated region
        $region93: #{tpu_custom_call.1} parent=91 // pred_check
          %p1236 = pneg %p265
        $region94: #{tpu_custom_call.1} parent=91 // pred_check_branch
          %1238 = sbr.rel (%p1236) target = $region96
        $region95: #{tpu_custom_call.1} parent=91 // pred_region
          %s1239 = sand.u32 %s250, 1
          %s1240 = scalar_lea.sflag [#allocation4], %s1239
          %s1241 = sand.u32 %s250, 1
          %s1242 = smul.addr %s1241, 8
          %s1243 = scalar_lea.vmem [#allocation14], %s1242
          %1244 = dma.done %s1240, 128
        $region96: #{tpu_custom_call.1} parent=91 // pred_fallthru
          _
        // Predicated region
        $region97: #{tpu_custom_call.1} parent=91 // pred_check
          %p1245 = pneg %p293
        $region98: #{tpu_custom_call.1} parent=91 // pred_check_branch
          %1247 = sbr.rel (%p1245) target = $region100
        $region99: #{tpu_custom_call.1} parent=91 // pred_region
          %s1248 = sand.u32 %s278, 1
          %s1249 = scalar_lea.sflag [#allocation16], %s1248
          %s1250 = sand.u32 %s278, 1
          %s1251 = smul.addr %s1250, 16
          %s1252 = scalar_lea.vmem [#allocation15], %s1251
          %1253 = dma.done %s1249, 256
        $region100: #{tpu_custom_call.1} parent=91 // pred_fallthru
          _
      $region92: #{tpu_custom_call.1} parent=5 // pred_fallthru
        _
    $region6: #{tpu_custom_call.1} parent=1 // loop_footer
      %s34 = sadd.s32 1, %s30
    $region7: #{tpu_custom_call.1} parent=1 // loop_footer_branch
      %29 = sbr.rel target = $region3
    $region8: #{tpu_custom_call.1} parent=1 // loop_exit
      _
    %1254 = vsyncpa [#allocation3], 1
    %s1255 = scalar_lea.sflag [#allocation3], 1
    %1256 = vsyncpa %s1255, 1
    %1257 = vsyncpa [#allocation6], 1
    %s1258 = scalar_lea.sflag [#allocation6], 1
    %1259 = vsyncpa %s1258, 1
    %1260 = vsyncpa [#allocation9], 1
    %1261 = vsyncpa [#allocation12], 1
    %1262 = vsyncpa [#allocation4], 1
    %s1263 = scalar_lea.sflag [#allocation4], 1
    %1264 = vsyncpa %s1263, 1
    %1265 = vsyncpa [#allocation16], 1
    %s1266 = scalar_lea.sflag [#allocation16], 1
    %1267 = vsyncpa %s1266, 1

</llo_original>
